<compile_context>
chip_gen: v7x
topology: tpu7x:2x2x1
jax: 0.10.0
libtpu: 0.0.40
codegen_flags: <defaults>
</compile_context>

<pallas_src>
import functools

import numpy as np
import jax
import jax.numpy as jnp
from jax.experimental import pallas as pl
from jax.experimental.pallas import tpu as pltpu

BN_EPS = 1e-5


# ------------------------------ Pallas kernel -------------------------------

def _down1d_kernel(x_ref, halo_ref, w1_ref, w2_ref, s1_ref, b1_ref, s2_ref, b2_ref,
                   out_ref, pool_ref, mid_ref, *, tl, c_in, c_out):
    # x_ref    : (1, TL, 2*Cin)  bf16  -- pooling pairs folded into the lane dim
    # halo_ref : (1, 1, 4, 2*Cin) bf16 -- 2 pooled halo rows left + 2 right (reflect at ends)
    # w1_ref   : (3, Cin, Cout)  bf16    w2_ref: (3, Cout, Cout) bf16
    # s*/b*    : (1, Cout) f32 (folded BN)   out_ref: (1, TL, Cout) f32
    # pool_ref : (TL+4, Cin) f32 scratch     mid_ref: (TL+2, Cout) f32 scratch

    # ---- fused MaxPool1d(2): lane-split max (no strided HBM slices) ----
    xc = x_ref[0].astype(jnp.float32)                          # (TL, 2*Cin)
    pool_core = jnp.maximum(xc[:, :c_in], xc[:, c_in:])        # (TL, Cin)
    h = halo_ref[0, 0].astype(jnp.float32)                     # (4, 2*Cin)
    pool_halo = jnp.maximum(h[:, :c_in], h[:, c_in:])          # (4, Cin)
    pool_ref[0:2, :] = pool_halo[0:2, :]                       # pooled[s-2], pooled[s-1]
    pool_ref[2:tl + 2, :] = pool_core                          # pooled[s .. s+TL)
    pool_ref[tl + 2:tl + 4, :] = pool_halo[2:4, :]             # pooled[s+TL], pooled[s+TL+1]

    # ---- conv1 (k=3) + BN1 + ReLU -> mid rows for logical positions [s-1, s+TL+1) ----
    acc1 = jnp.zeros((tl + 2, c_out), jnp.float32)
    for k in range(3):
        acc1 += jnp.dot(pool_ref[k:k + tl + 2, :].astype(jnp.bfloat16),
                        w1_ref[k], preferred_element_type=jnp.float32)
    mid_ref[...] = jnp.maximum(acc1 * s1_ref[...] + b1_ref[...], 0.0)
    # (Dropout(0.2) is eval-mode identity.)

    # ---- reflect padding of the mid feature map at the global sequence ends ----
    t = pl.program_id(1)

    @pl.when(t == 0)
    def _():
        mid_ref[0:1, :] = mid_ref[2:3, :]            # mid_pad[-1]  = mid[1]

    @pl.when(t == pl.num_programs(1) - 1)
    def _():
        mid_ref[tl + 1:tl + 2, :] = mid_ref[tl - 1:tl, :]   # mid_pad[L2] = mid[L2-2]

    # ---- conv2 (k=3) + BN2 + ReLU -> output tile ----
    acc2 = jnp.zeros((tl, c_out), jnp.float32)
    for k in range(3):
        acc2 += jnp.dot(mid_ref[k:k + tl, :].astype(jnp.bfloat16),
                        w2_ref[k], preferred_element_type=jnp.float32)
    out_ref[0] = jnp.maximum(acc2 * s2_ref[...] + b2_ref[...], 0.0)


# --------------------------------- wrapper ----------------------------------

def fold_bn(bn):
    gamma, beta, mean, var = bn
    scale = gamma / jnp.sqrt(var + BN_EPS)
    shift = beta - mean * scale
    return scale, shift


def _pick_tile(l2, target):
    """Largest tile <= target that is a multiple of 8 and divides L2 (else full L2)."""
    if l2 <= target:
        return l2
    for t in range(min(target, l2), 7, -1):
        if t % 8 == 0 and l2 % t == 0:
            return t
    return l2


def down1d_forward(x_ncl, params, *, tile_l2=128):
    """Down_1D forward.  x_ncl: (B, C_in, L) f32, returns (B, C_out, L//2) f32."""
    B, C_in, L = x_ncl.shape
    assert L % 2 == 0, "MaxPool1d(2) path expects even length"
    L2 = L // 2
    assert L2 >= 4, "need at least 4 pooled positions for reflect padding"
    C_out = params['w1'].shape[0]
    TL = _pick_tile(L2, tile_l2)
    nT = L2 // TL

    # Channels-last; fold the pooling pair into the lane dim (free reshape); bf16 operands.
    x_nlc = jnp.transpose(x_ncl, (0, 2, 1)).astype(jnp.float32)        # (B, L, Cin)
    x_pairs = x_nlc.reshape(B, L2, 2 * C_in).astype(jnp.bfloat16)      # (B, L2, 2*Cin)

    # Per-tile pooled halo rows (2 left + 2 right); reflect indices at the global ends.
    halo_idx = np.empty((nT, 4), np.int32)
    for t in range(nT):
        s = t * TL
        left = [s - 2, s - 1] if t > 0 else [2, 1]                 # row 0 unused on tile 0
        right = [s + TL, s + TL + 1] if t < nT - 1 else [L2 - 2, L2 - 3]  # row 3 unused on last tile
        halo_idx[t] = left + right
    halo_idx = np.clip(halo_idx, 0, L2 - 1)
    halo = x_pairs[:, halo_idx.reshape(-1), :].reshape(B, nT, 4, 2 * C_in)

    # Weights (Cout, Cin, 3) -> (3, Cin, Cout) bf16; BN folded into f32 scale/shift.
    w1 = jnp.transpose(params['w1'], (2, 1, 0)).astype(jnp.bfloat16)
    w2 = jnp.transpose(params['w2'], (2, 1, 0)).astype(jnp.bfloat16)
    s1, b1 = fold_bn(params['bn1'])
    s2, b2 = fold_bn(params['bn2'])
    s1 = s1.reshape(1, C_out).astype(jnp.float32)
    b1 = b1.reshape(1, C_out).astype(jnp.float32)
    s2 = s2.reshape(1, C_out).astype(jnp.float32)
    b2 = b2.reshape(1, C_out).astype(jnp.float32)

    kernel = functools.partial(_down1d_kernel, tl=TL, c_in=C_in, c_out=C_out)
    out_nlc = pl.pallas_call(
        kernel,
        out_shape=jax.ShapeDtypeStruct((B, L2, C_out), jnp.float32),
        grid=(B, nT),
        in_specs=[
            pl.BlockSpec((1, TL, 2 * C_in), lambda b, t: (b, t, 0)),
            pl.BlockSpec((1, 1, 4, 2 * C_in), lambda b, t: (b, t, 0, 0)),
            pl.BlockSpec((3, C_in, C_out), lambda b, t: (0, 0, 0)),   # VMEM-resident weights
            pl.BlockSpec((3, C_out, C_out), lambda b, t: (0, 0, 0)),
            pl.BlockSpec((1, C_out), lambda b, t: (0, 0)),
            pl.BlockSpec((1, C_out), lambda b, t: (0, 0)),
            pl.BlockSpec((1, C_out), lambda b, t: (0, 0)),
            pl.BlockSpec((1, C_out), lambda b, t: (0, 0)),
        ],
        out_specs=pl.BlockSpec((1, TL, C_out), lambda b, t: (b, t, 0)),
        scratch_shapes=[
            pltpu.VMEM((TL + 4, C_in), jnp.float32),    # pooled tile + halo
            pltpu.VMEM((TL + 2, C_out), jnp.float32),   # mid feature tile + halo
        ],
        compiler_params=pltpu.CompilerParams(
            dimension_semantics=("parallel", "parallel")),
    )(x_pairs, halo, w1, w2, s1, b1, s2, b2)

    return jnp.transpose(out_nlc, (0, 2, 1))   # back to (B, C_out, L2)


# ------------------------------ reference (JAX) ------------------------------

def down1d_reference(x_ncl, params):
    x = jnp.transpose(x_ncl, (0, 2, 1)).astype(jnp.float32)    # (B, L, Cin)
    B, L, C_in = x.shape
    p = jnp.max(x.reshape(B, L // 2, 2, C_in), axis=2)         # MaxPool1d(2)

    def conv_bn_relu(h, w_oik, bn_p):
        hp = jnp.concatenate([h[:, 1:2, :], h, h[:, -2:-1, :]], axis=1)  # reflect pad 1
        wt = jnp.transpose(w_oik, (2, 1, 0))                   # (3, Cin, Cout)
        n = h.shape[1]
        y = sum(jnp.einsum('blc,cd->bld', hp[:, k:k + n, :], wt[k]) for k in range(3))
        scale, shift = fold_bn(bn_p)
        return jnp.maximum(y * scale + shift, 0.0)

    h = conv_bn_relu(p, params['w1'], params['bn1'])
    h = conv_bn_relu(h, params['w2'], params['bn2'])
    return jnp.transpose(h, (0, 2, 1))


# ---------------------------- parameter creation ----------------------------

def init_down1d(key, c_in, c_out):
    k1, k2, k3, k4 = jax.random.split(key, 4)

    def conv_w(k, co, ci):
        return jax.random.normal(k, (co, ci, 3), jnp.float32) / np.sqrt(ci * 3)

    def bn_params(k, c):
        a, b, c_, d = jax.random.split(k, 4)
        gamma = 1.0 + 0.1 * jax.random.normal(a, (c,), jnp.float32)
        beta = 0.1 * jax.random.normal(b, (c,), jnp.float32)
        mean = 0.1 * jax.random.normal(c_, (c,), jnp.float32)
        var = 0.5 + jax.random.uniform(d, (c,), jnp.float32)
        return (gamma, beta, mean, var)

    return dict(w1=conv_w(k1, c_out, c_in), bn1=bn_params(k2, c_out),
                w2=conv_w(k3, c_out, c_out), bn2=bn_params(k4, c_out))


# ----------------------------------- main ------------------------------------

if __name__ == "__main__":
    key = jax.random.PRNGKey(0)
    pkey, xkey = jax.random.split(key)
    B, C_in, C_out, L = 2, 32, 64, 256   # -> pooled length 128, 2 seq tiles of 64

    params = init_down1d(pkey, C_in, C_out)
    x = jax.random.normal(xkey, (B, C_in, L), jnp.float32)

    fwd = jax.jit(functools.partial(down1d_forward, tile_l2=64))
    out = jax.block_until_ready(fwd(x, params))
    assert out.shape == (B, C_out, L // 2), out.shape
    assert bool(jnp.all(jnp.isfinite(out)))

    ref = down1d_reference(x, params)
    rel = float(jnp.sqrt(jnp.sum((out - ref) ** 2)) /
                (jnp.sqrt(jnp.sum(ref ** 2)) + 1e-12))
    assert rel < 5e-2, f"relative L2 error too high vs f32 reference: {rel}"
    print("KERNEL_OK")
</pallas_src>

<mosaic_0001>
module attributes {stable_mosaic.version = 11 : i64} {
  func.func @_down1d_kernel(%arg0: i32, %arg1: i32, %arg2: memref<1x64x64xbf16, #tpu.memory_space<vmem>>, %arg3: memref<1x1x4x64xbf16, #tpu.memory_space<vmem>>, %arg4: memref<3x32x64xbf16, #tpu.memory_space<vmem>>, %arg5: memref<3x64x64xbf16, #tpu.memory_space<vmem>>, %arg6: memref<1x64xf32, #tpu.memory_space<vmem>>, %arg7: memref<1x64xf32, #tpu.memory_space<vmem>>, %arg8: memref<1x64xf32, #tpu.memory_space<vmem>>, %arg9: memref<1x64xf32, #tpu.memory_space<vmem>>, %arg10: memref<1x64x64xf32, #tpu.memory_space<vmem>>, %arg11: memref<68x32xf32, #tpu.memory_space<vmem>>, %arg12: memref<66x64xf32, #tpu.memory_space<vmem>>) attributes {dimension_semantics = [#tpu.dimension_semantics<parallel>, #tpu.dimension_semantics<parallel>], iteration_bounds = array<i64: 2, 2>, scalar_prefetch = 0 : i64, scratch_operands = 2 : i64, tpu.core_type = #tpu.core_type<tc>, window_params = [{transform_indices = @transform_0, window_bounds = array<i64: 1, 64, 64>}, {transform_indices = @transform_1, window_bounds = array<i64: 1, 1, 4, 64>}, {pipeline_mode = #tpu.pipeline_mode<synchronous>, transform_indices = @transform_2, window_bounds = array<i64: 3, 32, 64>}, {pipeline_mode = #tpu.pipeline_mode<synchronous>, transform_indices = @transform_3, window_bounds = array<i64: 3, 64, 64>}, {pipeline_mode = #tpu.pipeline_mode<synchronous>, transform_indices = @transform_4, window_bounds = array<i64: 1, 64>}, {pipeline_mode = #tpu.pipeline_mode<synchronous>, transform_indices = @transform_5, window_bounds = array<i64: 1, 64>}, {pipeline_mode = #tpu.pipeline_mode<synchronous>, transform_indices = @transform_6, window_bounds = array<i64: 1, 64>}, {pipeline_mode = #tpu.pipeline_mode<synchronous>, transform_indices = @transform_7, window_bounds = array<i64: 1, 64>}, {transform_indices = @transform_8, window_bounds = array<i64: 1, 64, 64>}]} {
    %c0 = arith.constant 0 : index
    %c0_0 = arith.constant 0 : index
    %c0_1 = arith.constant 0 : index
    %0 = vector.load %arg2[%c0, %c0_0, %c0_1] : memref<1x64x64xbf16, #tpu.memory_space<vmem>>, vector<1x64x64xbf16>
    %1 = vector.shape_cast %0 : vector<1x64x64xbf16> to vector<64x64xbf16>
    %2 = arith.extf %1 : vector<64x64xbf16> to vector<64x64xf32>
    %3 = vector.extract_strided_slice %2 {offsets = [0, 0], sizes = [64, 32], strides = [1, 1]} : vector<64x64xf32> to vector<64x32xf32>
    %4 = vector.extract_strided_slice %2 {offsets = [0, 32], sizes = [64, 32], strides = [1, 1]} : vector<64x64xf32> to vector<64x32xf32>
    %5 = arith.maximumf %3, %4 : vector<64x32xf32>
    %c0_2 = arith.constant 0 : index
    %c0_3 = arith.constant 0 : index
    %c0_4 = arith.constant 0 : index
    %c0_5 = arith.constant 0 : index
    %6 = vector.load %arg3[%c0_2, %c0_3, %c0_4, %c0_5] : memref<1x1x4x64xbf16, #tpu.memory_space<vmem>>, vector<1x1x4x64xbf16>
    %7 = vector.shape_cast %6 : vector<1x1x4x64xbf16> to vector<4x64xbf16>
    %8 = arith.extf %7 : vector<4x64xbf16> to vector<4x64xf32>
    %9 = vector.extract_strided_slice %8 {offsets = [0, 0], sizes = [4, 32], strides = [1, 1]} : vector<4x64xf32> to vector<4x32xf32>
    %10 = vector.extract_strided_slice %8 {offsets = [0, 32], sizes = [4, 32], strides = [1, 1]} : vector<4x64xf32> to vector<4x32xf32>
    %11 = arith.maximumf %9, %10 : vector<4x32xf32>
    %12 = vector.extract_strided_slice %11 {offsets = [0, 0], sizes = [2, 32], strides = [1, 1]} : vector<4x32xf32> to vector<2x32xf32>
    %c0_6 = arith.constant 0 : index
    %c0_7 = arith.constant 0 : index
    %13 = vector.load %arg11[%c0_6, %c0_7] : memref<68x32xf32, #tpu.memory_space<vmem>>, vector<2x32xf32>
    tpu.vector_store %arg11[%c0_6, %c0_7], %12 {strides = array<i32>} : memref<68x32xf32, #tpu.memory_space<vmem>>, vector<2x32xf32>,
    %c2 = arith.constant 2 : index
    %c0_8 = arith.constant 0 : index
    %14 = vector.load %arg11[%c2, %c0_8] : memref<68x32xf32, #tpu.memory_space<vmem>>, vector<64x32xf32>
    tpu.vector_store %arg11[%c2, %c0_8], %5 {strides = array<i32>} : memref<68x32xf32, #tpu.memory_space<vmem>>, vector<64x32xf32>,
    %15 = vector.extract_strided_slice %11 {offsets = [2, 0], sizes = [2, 32], strides = [1, 1]} : vector<4x32xf32> to vector<2x32xf32>
    %c66 = arith.constant 66 : index
    %c0_9 = arith.constant 0 : index
    %16 = vector.load %arg11[%c66, %c0_9] : memref<68x32xf32, #tpu.memory_space<vmem>>, vector<2x32xf32>
    tpu.vector_store %arg11[%c66, %c0_9], %15 {strides = array<i32>} : memref<68x32xf32, #tpu.memory_space<vmem>>, vector<2x32xf32>,
    %cst = arith.constant 0.000000e+00 : f32
    %17 = vector.broadcast %cst : f32 to vector<66x64xf32>
    %c0_10 = arith.constant 0 : index
    %c0_11 = arith.constant 0 : index
    %18 = vector.load %arg11[%c0_10, %c0_11] : memref<68x32xf32, #tpu.memory_space<vmem>>, vector<66x32xf32>
    %19 = arith.truncf %18 : vector<66x32xf32> to vector<66x32xbf16>
    %c0_12 = arith.constant 0 : index
    %c0_13 = arith.constant 0 : index
    %c0_14 = arith.constant 0 : index
    %20 = vector.load %arg4[%c0_12, %c0_13, %c0_14] : memref<3x32x64xbf16, #tpu.memory_space<vmem>>, vector<1x32x64xbf16>
    %21 = vector.shape_cast %20 : vector<1x32x64xbf16> to vector<32x64xbf16>
    %cst_15 = arith.constant dense<0.000000e+00> : vector<66x64xf32>
    %22 = tpu.matmul %19, %21, %cst_15 {dimension_numbers = #tpu.dot_dimension_numbers<[1], [0], [0], [1], [0, 0, 1, 1], [], []>} : vector<66x32xbf16>, vector<32x64xbf16>, vector<66x64xf32> -> vector<66x64xf32>
    %23 = arith.addf %17, %22 : vector<66x64xf32>
    %c1 = arith.constant 1 : index
    %c0_16 = arith.constant 0 : index
    %24 = vector.load %arg11[%c1, %c0_16] : memref<68x32xf32, #tpu.memory_space<vmem>>, vector<66x32xf32>
    %25 = arith.truncf %24 : vector<66x32xf32> to vector<66x32xbf16>
    %c1_17 = arith.constant 1 : index
    %c0_18 = arith.constant 0 : index
    %c0_19 = arith.constant 0 : index
    %26 = vector.load %arg4[%c1_17, %c0_18, %c0_19] : memref<3x32x64xbf16, #tpu.memory_space<vmem>>, vector<1x32x64xbf16>
    %27 = vector.shape_cast %26 : vector<1x32x64xbf16> to vector<32x64xbf16>
    %cst_20 = arith.constant dense<0.000000e+00> : vector<66x64xf32>
    %28 = tpu.matmul %25, %27, %cst_20 {dimension_numbers = #tpu.dot_dimension_numbers<[1], [0], [0], [1], [0, 0, 1, 1], [], []>} : vector<66x32xbf16>, vector<32x64xbf16>, vector<66x64xf32> -> vector<66x64xf32>
    %29 = arith.addf %23, %28 : vector<66x64xf32>
    %c2_21 = arith.constant 2 : index
    %c0_22 = arith.constant 0 : index
    %30 = vector.load %arg11[%c2_21, %c0_22] : memref<68x32xf32, #tpu.memory_space<vmem>>, vector<66x32xf32>
    %31 = arith.truncf %30 : vector<66x32xf32> to vector<66x32xbf16>
    %c2_23 = arith.constant 2 : index
    %c0_24 = arith.constant 0 : index
    %c0_25 = arith.constant 0 : index
    %32 = vector.load %arg4[%c2_23, %c0_24, %c0_25] : memref<3x32x64xbf16, #tpu.memory_space<vmem>>, vector<1x32x64xbf16>
    %33 = vector.shape_cast %32 : vector<1x32x64xbf16> to vector<32x64xbf16>
    %cst_26 = arith.constant dense<0.000000e+00> : vector<66x64xf32>
    %34 = tpu.matmul %31, %33, %cst_26 {dimension_numbers = #tpu.dot_dimension_numbers<[1], [0], [0], [1], [0, 0, 1, 1], [], []>} : vector<66x32xbf16>, vector<32x64xbf16>, vector<66x64xf32> -> vector<66x64xf32>
    %35 = arith.addf %29, %34 : vector<66x64xf32>
    %c0_27 = arith.constant 0 : index
    %c0_28 = arith.constant 0 : index
    %36 = vector.load %arg6[%c0_27, %c0_28] : memref<1x64xf32, #tpu.memory_space<vmem>>, vector<1x64xf32>
    %37 = vector.broadcast %36 : vector<1x64xf32> to vector<66x64xf32>
    %38 = arith.mulf %35, %37 : vector<66x64xf32>
    %c0_29 = arith.constant 0 : index
    %c0_30 = arith.constant 0 : index
    %39 = vector.load %arg7[%c0_29, %c0_30] : memref<1x64xf32, #tpu.memory_space<vmem>>, vector<1x64xf32>
    %40 = vector.broadcast %39 : vector<1x64xf32> to vector<66x64xf32>
    %41 = arith.addf %38, %40 : vector<66x64xf32>
    %cst_31 = arith.constant 0.000000e+00 : f32
    %42 = vector.broadcast %cst_31 : f32 to vector<66x64xf32>
    %43 = arith.maximumf %41, %42 : vector<66x64xf32>
    %c0_32 = arith.constant 0 : index
    %c0_33 = arith.constant 0 : index
    %44 = vector.load %arg12[%c0_32, %c0_33] : memref<66x64xf32, #tpu.memory_space<vmem>>, vector<66x64xf32>
    tpu.vector_store %arg12[%c0_32, %c0_33], %43 {strides = array<i32>} : memref<66x64xf32, #tpu.memory_space<vmem>>, vector<66x64xf32>,
    %c0_i32 = arith.constant 0 : i32
    %45 = arith.cmpi eq, %arg1, %c0_i32 : i32
    %46 = arith.extui %45 : i1 to i32
    %c0_i32_34 = arith.constant 0 : i32
    %47 = arith.cmpi ne, %46, %c0_i32_34 : i32
    scf.if %47 {
      %c2_63 = arith.constant 2 : index
      %c0_64 = arith.constant 0 : index
      %81 = vector.load %arg12[%c2_63, %c0_64] : memref<66x64xf32, #tpu.memory_space<vmem>>, vector<1x64xf32>
      %c0_65 = arith.constant 0 : index
      %c0_66 = arith.constant 0 : index
      %82 = vector.load %arg12[%c0_65, %c0_66] : memref<66x64xf32, #tpu.memory_space<vmem>>, vector<1x64xf32>
      tpu.vector_store %arg12[%c0_65, %c0_66], %81 {strides = array<i32>} : memref<66x64xf32, #tpu.memory_space<vmem>>, vector<1x64xf32>,
    } else {
    }
    %c1_i32 = arith.constant 1 : i32
    %48 = arith.cmpi eq, %arg1, %c1_i32 : i32
    %49 = arith.extui %48 : i1 to i32
    %c0_i32_35 = arith.constant 0 : i32
    %50 = arith.cmpi ne, %49, %c0_i32_35 : i32
    scf.if %50 {
      %c63 = arith.constant 63 : index
      %c0_63 = arith.constant 0 : index
      %81 = vector.load %arg12[%c63, %c0_63] : memref<66x64xf32, #tpu.memory_space<vmem>>, vector<1x64xf32>
      %c65 = arith.constant 65 : index
      %c0_64 = arith.constant 0 : index
      %82 = vector.load %arg12[%c65, %c0_64] : memref<66x64xf32, #tpu.memory_space<vmem>>, vector<1x64xf32>
      tpu.vector_store %arg12[%c65, %c0_64], %81 {strides = array<i32>} : memref<66x64xf32, #tpu.memory_space<vmem>>, vector<1x64xf32>,
    } else {
    }
    %cst_36 = arith.constant 0.000000e+00 : f32
    %51 = vector.broadcast %cst_36 : f32 to vector<64x64xf32>
    %c0_37 = arith.constant 0 : index
    %c0_38 = arith.constant 0 : index
    %52 = vector.load %arg12[%c0_37, %c0_38] : memref<66x64xf32, #tpu.memory_space<vmem>>, vector<64x64xf32>
    %53 = arith.truncf %52 : vector<64x64xf32> to vector<64x64xbf16>
    %c0_39 = arith.constant 0 : index
    %c0_40 = arith.constant 0 : index
    %c0_41 = arith.constant 0 : index
    %54 = vector.load %arg5[%c0_39, %c0_40, %c0_41] : memref<3x64x64xbf16, #tpu.memory_space<vmem>>, vector<1x64x64xbf16>
    %55 = vector.shape_cast %54 : vector<1x64x64xbf16> to vector<64x64xbf16>
    %cst_42 = arith.constant dense<0.000000e+00> : vector<64x64xf32>
    %56 = tpu.matmul %53, %55, %cst_42 {dimension_numbers = #tpu.dot_dimension_numbers<[1], [0], [0], [1], [0, 0, 1, 1], [], []>} : vector<64x64xbf16>, vector<64x64xbf16>, vector<64x64xf32> -> vector<64x64xf32>
    %57 = arith.addf %51, %56 : vector<64x64xf32>
    %c1_43 = arith.constant 1 : index
    %c0_44 = arith.constant 0 : index
    %58 = vector.load %arg12[%c1_43, %c0_44] : memref<66x64xf32, #tpu.memory_space<vmem>>, vector<64x64xf32>
    %59 = arith.truncf %58 : vector<64x64xf32> to vector<64x64xbf16>
    %c1_45 = arith.constant 1 : index
    %c0_46 = arith.constant 0 : index
    %c0_47 = arith.constant 0 : index
    %60 = vector.load %arg5[%c1_45, %c0_46, %c0_47] : memref<3x64x64xbf16, #tpu.memory_space<vmem>>, vector<1x64x64xbf16>
    %61 = vector.shape_cast %60 : vector<1x64x64xbf16> to vector<64x64xbf16>
    %cst_48 = arith.constant dense<0.000000e+00> : vector<64x64xf32>
    %62 = tpu.matmul %59, %61, %cst_48 {dimension_numbers = #tpu.dot_dimension_numbers<[1], [0], [0], [1], [0, 0, 1, 1], [], []>} : vector<64x64xbf16>, vector<64x64xbf16>, vector<64x64xf32> -> vector<64x64xf32>
    %63 = arith.addf %57, %62 : vector<64x64xf32>
    %c2_49 = arith.constant 2 : index
    %c0_50 = arith.constant 0 : index
    %64 = vector.load %arg12[%c2_49, %c0_50] : memref<66x64xf32, #tpu.memory_space<vmem>>, vector<64x64xf32>
    %65 = arith.truncf %64 : vector<64x64xf32> to vector<64x64xbf16>
    %c2_51 = arith.constant 2 : index
    %c0_52 = arith.constant 0 : index
    %c0_53 = arith.constant 0 : index
    %66 = vector.load %arg5[%c2_51, %c0_52, %c0_53] : memref<3x64x64xbf16, #tpu.memory_space<vmem>>, vector<1x64x64xbf16>
    %67 = vector.shape_cast %66 : vector<1x64x64xbf16> to vector<64x64xbf16>
    %cst_54 = arith.constant dense<0.000000e+00> : vector<64x64xf32>
    %68 = tpu.matmul %65, %67, %cst_54 {dimension_numbers = #tpu.dot_dimension_numbers<[1], [0], [0], [1], [0, 0, 1, 1], [], []>} : vector<64x64xbf16>, vector<64x64xbf16>, vector<64x64xf32> -> vector<64x64xf32>
    %69 = arith.addf %63, %68 : vector<64x64xf32>
    %c0_55 = arith.constant 0 : index
    %c0_56 = arith.constant 0 : index
    %70 = vector.load %arg8[%c0_55, %c0_56] : memref<1x64xf32, #tpu.memory_space<vmem>>, vector<1x64xf32>
    %71 = vector.broadcast %70 : vector<1x64xf32> to vector<64x64xf32>
    %72 = arith.mulf %69, %71 : vector<64x64xf32>
    %c0_57 = arith.constant 0 : index
    %c0_58 = arith.constant 0 : index
    %73 = vector.load %arg9[%c0_57, %c0_58] : memref<1x64xf32, #tpu.memory_space<vmem>>, vector<1x64xf32>
    %74 = vector.broadcast %73 : vector<1x64xf32> to vector<64x64xf32>
    %75 = arith.addf %72, %74 : vector<64x64xf32>
    %cst_59 = arith.constant 0.000000e+00 : f32
    %76 = vector.broadcast %cst_59 : f32 to vector<64x64xf32>
    %77 = arith.maximumf %75, %76 : vector<64x64xf32>
    %c0_60 = arith.constant 0 : index
    %c0_61 = arith.constant 0 : index
    %c0_62 = arith.constant 0 : index
    %78 = vector.load %arg10[%c0_60, %c0_61, %c0_62] : memref<1x64x64xf32, #tpu.memory_space<vmem>>, vector<1x64x64xf32>
    %79 = vector.shape_cast %78 : vector<1x64x64xf32> to vector<64x64xf32>
    %80 = vector.shape_cast %77 : vector<64x64xf32> to vector<1x64x64xf32>
    tpu.vector_store %arg10[%c0_60, %c0_61, %c0_62], %80 {strides = array<i32>} : memref<1x64x64xf32, #tpu.memory_space<vmem>>, vector<1x64x64xf32>,
    return
  }
  func.func @transform_0(%arg0: i32, %arg1: i32) -> (i32, i32, i32) {
    %c0_i32 = arith.constant 0 : i32
    %c0_i32_0 = arith.constant 0 : i32
    return %arg0, %arg1, %c0_i32 : i32, i32, i32
  }
  func.func @transform_1(%arg0: i32, %arg1: i32) -> (i32, i32, i32, i32) {
    %c0_i32 = arith.constant 0 : i32
    %c0_i32_0 = arith.constant 0 : i32
    %c0_i32_1 = arith.constant 0 : i32
    return %arg0, %arg1, %c0_i32, %c0_i32_0 : i32, i32, i32, i32
  }
  func.func @transform_2(%arg0: i32, %arg1: i32) -> (i32, i32, i32) {
    %c0_i32 = arith.constant 0 : i32
    %c0_i32_0 = arith.constant 0 : i32
    %c0_i32_1 = arith.constant 0 : i32
    %c0_i32_2 = arith.constant 0 : i32
    return %c0_i32, %c0_i32_0, %c0_i32_1 : i32, i32, i32
  }
  func.func @transform_3(%arg0: i32, %arg1: i32) -> (i32, i32, i32) {
    %c0_i32 = arith.constant 0 : i32
    %c0_i32_0 = arith.constant 0 : i32
    %c0_i32_1 = arith.constant 0 : i32
    %c0_i32_2 = arith.constant 0 : i32
    return %c0_i32, %c0_i32_0, %c0_i32_1 : i32, i32, i32
  }
  func.func @transform_4(%arg0: i32, %arg1: i32) -> (i32, i32) {
    %c0_i32 = arith.constant 0 : i32
    %c0_i32_0 = arith.constant 0 : i32
    %c0_i32_1 = arith.constant 0 : i32
    return %c0_i32, %c0_i32_0 : i32, i32
  }
  func.func @transform_5(%arg0: i32, %arg1: i32) -> (i32, i32) {
    %c0_i32 = arith.constant 0 : i32
    %c0_i32_0 = arith.constant 0 : i32
    %c0_i32_1 = arith.constant 0 : i32
    return %c0_i32, %c0_i32_0 : i32, i32
  }
  func.func @transform_6(%arg0: i32, %arg1: i32) -> (i32, i32) {
    %c0_i32 = arith.constant 0 : i32
    %c0_i32_0 = arith.constant 0 : i32
    %c0_i32_1 = arith.constant 0 : i32
    return %c0_i32, %c0_i32_0 : i32, i32
  }
  func.func @transform_7(%arg0: i32, %arg1: i32) -> (i32, i32) {
    %c0_i32 = arith.constant 0 : i32
    %c0_i32_0 = arith.constant 0 : i32
    %c0_i32_1 = arith.constant 0 : i32
    return %c0_i32, %c0_i32_0 : i32, i32
  }
  func.func @transform_8(%arg0: i32, %arg1: i32) -> (i32, i32, i32) {
    %c0_i32 = arith.constant 0 : i32
    %c0_i32_0 = arith.constant 0 : i32
    return %arg0, %arg1, %c0_i32 : i32, i32, i32
  }
}

</mosaic_0001>

<llo_original>
// kernel: down1d_forward.1
$region0: #{down1d_forward.1}
  #allocation0 [shape = 'u32[]', space=smem, size = 0x4, offset = 0x4, fixed_abs, tag = 'smem constant byte address 0x4 - core index']
  #allocation1 [shape = 'u32[144,128]{1,0:T(1,128)}', space=vmem, size = 0x12000, scoped, tag = 'internal scratch']
  #allocation2 [shape = 'f32[68,32]{1,0:T(8,128)}', space=vmem, size = 0x9000, scoped, tag = 'scratch operand']
  #allocation3 [shape = 'f32[66,64]{1,0:T(8,128)}', space=vmem, size = 0x9000, scoped, tag = 'scratch operand']
  %s0 = inlined_call_operand.vmem [shape: bf16[2,128,64], index: 0, kind: input, shape index: {}]
  %s1 = inlined_call_operand.vmem [shape: bf16[2,2,4,64], index: 1, kind: input, shape index: {}]
  %s2 = inlined_call_operand.vmem [shape: bf16[3,32,64], index: 2, kind: input, shape index: {}]
  %s3 = inlined_call_operand.vmem [shape: bf16[3,64,64], index: 3, kind: input, shape index: {}]
  %s4 = inlined_call_operand.vmem [shape: f32[1,64], index: 4, kind: input, shape index: {}]
  %s5 = inlined_call_operand.vmem [shape: f32[1,64], index: 5, kind: input, shape index: {}]
  %s6 = inlined_call_operand.vmem [shape: f32[1,64], index: 6, kind: input, shape index: {}]
  %s7 = inlined_call_operand.vmem [shape: f32[1,64], index: 7, kind: input, shape index: {}]
  %s8 = inlined_call_operand.vmem [shape: f32[2,128,64], index: 8, kind: output, shape index: {}]
  %s9 = sld [smem:[#allocation0]]
  $region73: #{down1d_forward.1} parent=0
    _
  %s11 = ssub.s32 1, %s9
  %s12 = scalar_select 0, %s11, %s9
  loop: start=0, step=1, limit=6
  $region2: #{down1d_forward.1} parent=0 // loop_pre_header
    _
  $region3: #{down1d_forward.1} parent=0 // loop_header
    %s14 = sphi 0, %s18
    %p15 = scmp.ge.s32.totalorder %s14, 6
    %s21 = sphi 0, %s33
    %s22 = sphi 0, %s29
    %s23 = sphi 0, %s21
    %s24 = sphi 0, %s22
    %s25 = sphi 0, %s23
    %s26 = sphi 0, %s24
    %s38 = sphi 0, %s40
    %s41 = sphi 0, %s38
    %s42 = sphi 0, %s41
    %s58 = sphi 0, %s42
    %s66 = sphi 0, %s68
    %s69 = sphi 0, %s66
    %s70 = sphi 0, %s69
    %s86 = sphi 0, %s70
    %s90 = sphi 0, %s90
    %s92 = sphi 0, %s90
    %s93 = sphi 0, %s92
    %s107 = sphi 0, %s93
    %s111 = sphi 0, %s111
    %s113 = sphi 0, %s111
    %s114 = sphi 0, %s113
    %s128 = sphi 0, %s114
    %s132 = sphi 0, %s132
    %s134 = sphi 0, %s132
    %s135 = sphi 0, %s134
    %s149 = sphi 0, %s135
    %s153 = sphi 0, %s153
    %s155 = sphi 0, %s153
    %s156 = sphi 0, %s155
    %s170 = sphi 0, %s156
    %s174 = sphi 0, %s174
    %s176 = sphi 0, %s174
    %s177 = sphi 0, %s176
    %s191 = sphi 0, %s177
    %s195 = sphi 0, %s195
    %s197 = sphi 0, %s195
    %s198 = sphi 0, %s197
    %s212 = sphi 0, %s198
    %s220 = sphi 0, %s222
    %s223 = sphi 0, %s220
    %s224 = sphi 0, %s223
    %s240 = sphi 0, %s224
  $region4: #{down1d_forward.1} parent=0 // loop_header_branch
    %17 = sbr.rel (%p15) target = $region8
  $region5: #{down1d_forward.1} parent=0 // loop_body
    %s19 = ssub.s32 %s14, 1
    %s20 = ssub.s32 %s14, 2
    %s27 = sadd.s32 1, %s22
    %p28 = scmp.ge.s32.totalorder %s27, 2
    %s29 = scalar_select %p28, 0, %s27
    %s30 = sadd.s32 1, %s21
    %s31 = scalar_select %p28, %s30, %s21
    %p32 = scmp.ge.s32.totalorder %s31, 2
    %s33 = scalar_select %p32, 0, %s31
    %s34 = ssub.s32 %s21, %s33
    %s35 = ssub.s32 %s22, %s29
    %s36 = sor.u32 %s34, %s35
    %p37 = scmp.eq.s32.totalorder %s36, 0
    %s39 = sadd.s32 %s38, 1
    %s40 = scalar_select %p37, %s38, %s39
    %p43 = pneg %p37
    %p44 = scmp.eq.s32.totalorder %s14, 3
    %p45 = por %p43, %p44
    %p46 = scmp.ne.s32.totalorder %s38, %s41
    %p47 = scmp.eq.s32.totalorder %s14, 0
    %p48 = por %p46, %p47
    %p49 = scmp.ne.s32.totalorder %s38, %s41
    %p50 = scmp.eq.s32.totalorder %s19, 3
    %p51 = por %p49, %p50
    %p52 = scmp.ne.s32.totalorder %s41, %s42
    %p53 = scmp.eq.s32.totalorder %s19, 0
    %p54 = por %p52, %p53
    %p55 = scmp.ne.s32.totalorder %s41, %s42
    %p56 = scmp.eq.s32.totalorder %s20, 3
    %p57 = por %p55, %p56
    %p59 = scmp.ne.s32.totalorder %s42, %s58
    %p60 = scmp.eq.s32.totalorder %s20, 0
    %p61 = por %p59, %p60
    %s62 = ssub.s32 %s21, %s33
    %s63 = ssub.s32 %s22, %s29
    %s64 = sor.u32 %s62, %s63
    %p65 = scmp.eq.s32.totalorder %s64, 0
    %s67 = sadd.s32 %s66, 1
    %s68 = scalar_select %p65, %s66, %s67
    %p71 = pneg %p65
    %p72 = scmp.eq.s32.totalorder %s14, 3
    %p73 = por %p71, %p72
    %p74 = scmp.ne.s32.totalorder %s66, %s69
    %p75 = scmp.eq.s32.totalorder %s14, 0
    %p76 = por %p74, %p75
    %p77 = scmp.ne.s32.totalorder %s66, %s69
    %p78 = scmp.eq.s32.totalorder %s19, 3
    %p79 = por %p77, %p78
    %p80 = scmp.ne.s32.totalorder %s69, %s70
    %p81 = scmp.eq.s32.totalorder %s19, 0
    %p82 = por %p80, %p81
    %p83 = scmp.ne.s32.totalorder %s69, %s70
    %p84 = scmp.eq.s32.totalorder %s20, 3
    %p85 = por %p83, %p84
    %p87 = scmp.ne.s32.totalorder %s70, %s86
    %p88 = scmp.eq.s32.totalorder %s20, 0
    %p89 = por %p87, %p88
    %s91 = sadd.s32 %s90, 1
    %p94 = scmp.eq.s32.totalorder %s14, 3
    %p95 = scmp.ne.s32.totalorder %s90, %s92
    %p96 = scmp.eq.s32.totalorder %s14, 0
    %p97 = por %p95, %p96
    %p98 = scmp.ne.s32.totalorder %s90, %s92
    %p99 = scmp.eq.s32.totalorder %s19, 3
    %p100 = por %p98, %p99
    %p101 = scmp.ne.s32.totalorder %s92, %s93
    %p102 = scmp.eq.s32.totalorder %s19, 0
    %p103 = por %p101, %p102
    %p104 = scmp.ne.s32.totalorder %s92, %s93
    %p105 = scmp.eq.s32.totalorder %s20, 3
    %p106 = por %p104, %p105
    %p108 = scmp.ne.s32.totalorder %s93, %s107
    %p109 = scmp.eq.s32.totalorder %s20, 0
    %p110 = por %p108, %p109
    %s112 = sadd.s32 %s111, 1
    %p115 = scmp.eq.s32.totalorder %s14, 3
    %p116 = scmp.ne.s32.totalorder %s111, %s113
    %p117 = scmp.eq.s32.totalorder %s14, 0
    %p118 = por %p116, %p117
    %p119 = scmp.ne.s32.totalorder %s111, %s113
    %p120 = scmp.eq.s32.totalorder %s19, 3
    %p121 = por %p119, %p120
    %p122 = scmp.ne.s32.totalorder %s113, %s114
    %p123 = scmp.eq.s32.totalorder %s19, 0
    %p124 = por %p122, %p123
    %p125 = scmp.ne.s32.totalorder %s113, %s114
    %p126 = scmp.eq.s32.totalorder %s20, 3
    %p127 = por %p125, %p126
    %p129 = scmp.ne.s32.totalorder %s114, %s128
    %p130 = scmp.eq.s32.totalorder %s20, 0
    %p131 = por %p129, %p130
    %s133 = sadd.s32 %s132, 1
    %p136 = scmp.eq.s32.totalorder %s14, 3
    %p137 = scmp.ne.s32.totalorder %s132, %s134
    %p138 = scmp.eq.s32.totalorder %s14, 0
    %p139 = por %p137, %p138
    %p140 = scmp.ne.s32.totalorder %s132, %s134
    %p141 = scmp.eq.s32.totalorder %s19, 3
    %p142 = por %p140, %p141
    %p143 = scmp.ne.s32.totalorder %s134, %s135
    %p144 = scmp.eq.s32.totalorder %s19, 0
    %p145 = por %p143, %p144
    %p146 = scmp.ne.s32.totalorder %s134, %s135
    %p147 = scmp.eq.s32.totalorder %s20, 3
    %p148 = por %p146, %p147
    %p150 = scmp.ne.s32.totalorder %s135, %s149
    %p151 = scmp.eq.s32.totalorder %s20, 0
    %p152 = por %p150, %p151
    %s154 = sadd.s32 %s153, 1
    %p157 = scmp.eq.s32.totalorder %s14, 3
    %p158 = scmp.ne.s32.totalorder %s153, %s155
    %p159 = scmp.eq.s32.totalorder %s14, 0
    %p160 = por %p158, %p159
    %p161 = scmp.ne.s32.totalorder %s153, %s155
    %p162 = scmp.eq.s32.totalorder %s19, 3
    %p163 = por %p161, %p162
    %p164 = scmp.ne.s32.totalorder %s155, %s156
    %p165 = scmp.eq.s32.totalorder %s19, 0
    %p166 = por %p164, %p165
    %p167 = scmp.ne.s32.totalorder %s155, %s156
    %p168 = scmp.eq.s32.totalorder %s20, 3
    %p169 = por %p167, %p168
    %p171 = scmp.ne.s32.totalorder %s156, %s170
    %p172 = scmp.eq.s32.totalorder %s20, 0
    %p173 = por %p171, %p172
    %s175 = sadd.s32 %s174, 1
    %p178 = scmp.eq.s32.totalorder %s14, 3
    %p179 = scmp.ne.s32.totalorder %s174, %s176
    %p180 = scmp.eq.s32.totalorder %s14, 0
    %p181 = por %p179, %p180
    %p182 = scmp.ne.s32.totalorder %s174, %s176
    %p183 = scmp.eq.s32.totalorder %s19, 3
    %p184 = por %p182, %p183
    %p185 = scmp.ne.s32.totalorder %s176, %s177
    %p186 = scmp.eq.s32.totalorder %s19, 0
    %p187 = por %p185, %p186
    %p188 = scmp.ne.s32.totalorder %s176, %s177
    %p189 = scmp.eq.s32.totalorder %s20, 3
    %p190 = por %p188, %p189
    %p192 = scmp.ne.s32.totalorder %s177, %s191
    %p193 = scmp.eq.s32.totalorder %s20, 0
    %p194 = por %p192, %p193
    %s196 = sadd.s32 %s195, 1
    %p199 = scmp.eq.s32.totalorder %s14, 3
    %p200 = scmp.ne.s32.totalorder %s195, %s197
    %p201 = scmp.eq.s32.totalorder %s14, 0
    %p202 = por %p200, %p201
    %p203 = scmp.ne.s32.totalorder %s195, %s197
    %p204 = scmp.eq.s32.totalorder %s19, 3
    %p205 = por %p203, %p204
    %p206 = scmp.ne.s32.totalorder %s197, %s198
    %p207 = scmp.eq.s32.totalorder %s19, 0
    %p208 = por %p206, %p207
    %p209 = scmp.ne.s32.totalorder %s197, %s198
    %p210 = scmp.eq.s32.totalorder %s20, 3
    %p211 = por %p209, %p210
    %p213 = scmp.ne.s32.totalorder %s198, %s212
    %p214 = scmp.eq.s32.totalorder %s20, 0
    %p215 = por %p213, %p214
    %s216 = ssub.s32 %s21, %s33
    %s217 = ssub.s32 %s22, %s29
    %s218 = sor.u32 %s216, %s217
    %p219 = scmp.eq.s32.totalorder %s218, 0
    %s221 = sadd.s32 %s220, 1
    %s222 = scalar_select %p219, %s220, %s221
    %p225 = pneg %p219
    %p226 = scmp.eq.s32.totalorder %s14, 3
    %p227 = por %p225, %p226
    %p228 = scmp.ne.s32.totalorder %s220, %s223
    %p229 = scmp.eq.s32.totalorder %s14, 0
    %p230 = por %p228, %p229
    %p231 = scmp.ne.s32.totalorder %s220, %s223
    %p232 = scmp.eq.s32.totalorder %s19, 3
    %p233 = por %p231, %p232
    %p234 = scmp.ne.s32.totalorder %s223, %s224
    %p235 = scmp.eq.s32.totalorder %s19, 0
    %p236 = por %p234, %p235
    %p237 = scmp.ne.s32.totalorder %s223, %s224
    %p238 = scmp.eq.s32.totalorder %s20, 3
    %p239 = por %p237, %p238
    %p241 = scmp.ne.s32.totalorder %s224, %s240
    %p242 = scmp.eq.s32.totalorder %s20, 0
    %p243 = por %p241, %p242
    %p244 = scmp.le.s32.totalorder 1, %s14
    %p245 = scmp.lt.s32.totalorder %s14, 5
    %p246 = pnand %p244, %p245
    %p247 = pneg %p246
    // Predicated region
    $region9: #{down1d_forward.1} parent=5 // pred_check
      _
    $region10: #{down1d_forward.1} parent=5 // pred_check_branch
      %249 = sbr.rel (%p246) target = $region12
    $region11: #{down1d_forward.1} parent=5 // pred_region
      %s250 = ssub.s32 %s14, 1
      // Predicated region
      $region13: #{down1d_forward.1} parent=11 // pred_check
        %p251 = pneg %p103
      $region14: #{down1d_forward.1} parent=11 // pred_check_branch
        %253 = sbr.rel (%p251) target = $region16
      $region15: #{down1d_forward.1} parent=11 // pred_region
        _
      $region16: #{down1d_forward.1} parent=11 // pred_fallthru
        _
      // Predicated region
      $region17: #{down1d_forward.1} parent=11 // pred_check
        %p254 = pneg %p124
      $region18: #{down1d_forward.1} parent=11 // pred_check_branch
        %256 = sbr.rel (%p254) target = $region20
      $region19: #{down1d_forward.1} parent=11 // pred_region
        _
      $region20: #{down1d_forward.1} parent=11 // pred_fallthru
        _
      // Predicated region
      $region21: #{down1d_forward.1} parent=11 // pred_check
        %p257 = pneg %p145
      $region22: #{down1d_forward.1} parent=11 // pred_check_branch
        %259 = sbr.rel (%p257) target = $region24
      $region23: #{down1d_forward.1} parent=11 // pred_region
        _
      $region24: #{down1d_forward.1} parent=11 // pred_fallthru
        _
      // Predicated region
      $region25: #{down1d_forward.1} parent=11 // pred_check
        %p260 = pneg %p166
      $region26: #{down1d_forward.1} parent=11 // pred_check_branch
        %262 = sbr.rel (%p260) target = $region28
      $region27: #{down1d_forward.1} parent=11 // pred_region
        _
      $region28: #{down1d_forward.1} parent=11 // pred_fallthru
        _
      // Predicated region
      $region29: #{down1d_forward.1} parent=11 // pred_check
        %p263 = pneg %p187
      $region30: #{down1d_forward.1} parent=11 // pred_check_branch
        %265 = sbr.rel (%p263) target = $region32
      $region31: #{down1d_forward.1} parent=11 // pred_region
        _
      $region32: #{down1d_forward.1} parent=11 // pred_fallthru
        _
      // Predicated region
      $region33: #{down1d_forward.1} parent=11 // pred_check
        %p266 = pneg %p208
      $region34: #{down1d_forward.1} parent=11 // pred_check_branch
        %268 = sbr.rel (%p266) target = $region36
      $region35: #{down1d_forward.1} parent=11 // pred_region
        _
      $region36: #{down1d_forward.1} parent=11 // pred_fallthru
        _
    $region12: #{down1d_forward.1} parent=5 // pred_fallthru
      _
    %p269 = scmp.lt.s32.totalorder %s14, 4
    // Predicated region
    $region37: #{down1d_forward.1} parent=5 // pred_check
      %p270 = pneg %p269
    $region38: #{down1d_forward.1} parent=5 // pred_check_branch
      %272 = sbr.rel (%p270) target = $region40
    $region39: #{down1d_forward.1} parent=5 // pred_region
      // Predicated region
      $region41: #{down1d_forward.1} parent=39 // pred_check
        %p273 = pneg %p48
      $region42: #{down1d_forward.1} parent=39 // pred_check_branch
        %275 = sbr.rel (%p273) target = $region44
      $region43: #{down1d_forward.1} parent=39 // pred_region
        %s276 = smul.u32 8, %s22
        %p277 = scmp.lt.s32.totalorder %s21, 1
        %s278 = scalar_select %p277, %s21, 1
        %p279 = scmp.lt.s32.totalorder %s276, 15
        %s280 = scalar_select %p279, %s276, 15
        %s281 = smul.addr %s278, 16
        %s282 = sadd.s32 %s280, %s281
        %s283 = smul.addr %s282, 4
        %s284 = scalar_lea.vmem %s0, %s283
        %s285 = smul.u32 8, %s22
      $region44: #{down1d_forward.1} parent=39 // pred_fallthru
        _
      // Predicated region
      $region45: #{down1d_forward.1} parent=39 // pred_check
        %p286 = pneg %p76
      $region46: #{down1d_forward.1} parent=39 // pred_check_branch
        %288 = sbr.rel (%p286) target = $region48
      $region47: #{down1d_forward.1} parent=39 // pred_region
        %p289 = scmp.lt.s32.totalorder %s21, 1
        %s290 = scalar_select %p289, %s21, 1
        %p291 = scmp.lt.s32.totalorder %s22, 1
        %s292 = scalar_select %p291, %s22, 1
        %s293 = smul.addr %s290, 2
        %s294 = sadd.s32 %s292, %s293
        %s295 = smul.addr %s294, 2
        %s296 = scalar_lea.vmem %s1, %s295
      $region48: #{down1d_forward.1} parent=39 // pred_fallthru
        _
    $region40: #{down1d_forward.1} parent=5 // pred_fallthru
      _
    %p297 = scmp.le.s32.totalorder 1, %s14
    %p298 = scmp.lt.s32.totalorder %s14, 5
    %p299 = pnand %p297, %p298
    %p300 = pneg %p299
    // Predicated region
    $region49: #{down1d_forward.1} parent=5 // pred_check
      _
    $region50: #{down1d_forward.1} parent=5 // pred_check_branch
      %302 = sbr.rel (%p299) target = $region52
    $region51: #{down1d_forward.1} parent=5 // pred_region
      %s303 = ssub.s32 %s14, 1
      %s304 = smul.u32 8, %s24
      %p305 = scmp.lt.s32.totalorder %s23, 1
      %s306 = scalar_select %p305, %s23, 1
      %p307 = scmp.lt.s32.totalorder %s304, 15
      %s308 = scalar_select %p307, %s304, 15
      %s309 = smul.addr %s306, 16
      %s310 = sadd.s32 %s308, %s309
      %s311 = smul.addr %s310, 4
      %s312 = scalar_lea.vmem %s0, %s311
      %p313 = pneg %p54
      %p314 = pneg %p51
      %p315 = scmp.lt.s32.totalorder %s23, 1
      %s316 = scalar_select %p315, %s23, 1
      %p317 = scmp.lt.s32.totalorder %s24, 1
      %s318 = scalar_select %p317, %s24, 1
      %s319 = smul.addr %s316, 2
      %s320 = sadd.s32 %s318, %s319
      %s321 = smul.addr %s320, 2
      %s322 = scalar_lea.vmem %s1, %s321
      %p323 = pneg %p82
      %p324 = pneg %p79
      %p325 = pneg %p103
      %p326 = pneg %p100
      %p327 = pneg %p124
      %p328 = pneg %p121
      %p329 = pneg %p145
      %p330 = pneg %p142
      %p331 = pneg %p166
      %p332 = pneg %p163
      %p333 = pneg %p187
      %p334 = pneg %p184
      %p335 = pneg %p208
      %p336 = pneg %p205
      %p337 = pneg %p236
      %p338 = pneg %p233
      %s339 = smul.u32 8, %s24
      %p340 = scmp.lt.s32.totalorder %s23, 1
      %s341 = scalar_select %p340, %s23, 1
      %p342 = scmp.lt.s32.totalorder %s339, 15
      %s343 = scalar_select %p342, %s339, 15
      %s344 = smul.addr %s341, 16
      %s345 = sadd.s32 %s343, %s344
      %s346 = smul.addr %s345, 8
      %s347 = scalar_lea.vmem %s8, %s346
      %s348 = smul.u32 8, %s24
      %p349 = scmp.lt.s32.totalorder %s23, 1
      %s350 = scalar_select %p349, %s23, 1
      %p351 = scmp.lt.s32.totalorder %s348, 15
      %s352 = scalar_select %p351, %s348, 15
      %s353 = smul.addr %s350, 16
      %s354 = sadd.s32 %s352, %s353
      %s355 = smul.addr %s354, 4
      %s356 = scalar_lea.vmem %s0, %s355
      %s357 = smul.u32 8, %s24
      %p358 = scmp.lt.s32.totalorder %s23, 1
      %s359 = scalar_select %p358, %s23, 1
      %p360 = scmp.lt.s32.totalorder %s24, 1
      %s361 = scalar_select %p360, %s24, 1
      %s362 = smul.addr %s359, 2
      %s363 = sadd.s32 %s361, %s362
      %s364 = smul.addr %s363, 2
      %s365 = scalar_lea.vmem %s1, %s364
      %s366 = smul.u32 8, %s24
      %p367 = scmp.lt.s32.totalorder %s23, 1
      %s368 = scalar_select %p367, %s23, 1
      %p369 = scmp.lt.s32.totalorder %s366, 15
      %s370 = scalar_select %p369, %s366, 15
      %s371 = smul.addr %s368, 16
      %s372 = sadd.s32 %s370, %s371
      %s373 = smul.addr %s372, 8
      %s374 = scalar_lea.vmem %s8, %s373
      %s375 = smul.u32 8, %s24
      %v377 = vld [vmem:[%s356] sm:$0xf]
      %v378 = vld [vmem:[%s356 + $0x4] sm:$0xf]
      %v379 = vld [vmem:[%s356 + $0x8] sm:$0xf]
      %v380 = vld [vmem:[%s356 + $0xc] sm:$0xf]
      %v381 = vld [vmem:[%s356 + $0x10] sm:$0xf]
      %v382 = vld [vmem:[%s356 + $0x14] sm:$0xf]
      %v383 = vld [vmem:[%s356 + $0x18] sm:$0xf]
      %v384 = vld [vmem:[%s356 + $0x1c] sm:$0xf]
      %v385 = vunpack.c.l.bf16 %v377
      %v386 = vunpack.c.l.bf16 %v378
      %v387 = vunpack.c.l.bf16 %v379
      %v388 = vunpack.c.l.bf16 %v380
      %v389 = vunpack.c.l.bf16 %v381
      %v390 = vunpack.c.l.bf16 %v382
      %v391 = vunpack.c.l.bf16 %v383
      %v392 = vunpack.c.l.bf16 %v384
      %401 = vrot.lane.b32.xlu0 %v385, 96
      %v402 = vpop.permute.xlu0 %401
      %403 = vrot.lane.b32.xlu0 %v386, 96
      %v404 = vpop.permute.xlu0 %403
      %405 = vrot.lane.b32.xlu0 %v387, 96
      %v406 = vpop.permute.xlu0 %405
      %407 = vrot.lane.b32.xlu0 %v388, 96
      %v408 = vpop.permute.xlu0 %407
      %409 = vrot.lane.b32.xlu0 %v389, 96
      %v410 = vpop.permute.xlu0 %409
      %411 = vrot.lane.b32.xlu0 %v390, 96
      %v412 = vpop.permute.xlu0 %411
      %413 = vrot.lane.b32.xlu0 %v391, 96
      %v414 = vpop.permute.xlu0 %413
      %415 = vrot.lane.b32.xlu0 %v392, 96
      %v416 = vpop.permute.xlu0 %415
      %v425 = vmax.f32 %v385, %v402
      %v426 = vmax.f32 %v386, %v404
      %v427 = vmax.f32 %v387, %v406
      %v428 = vmax.f32 %v388, %v408
      %v429 = vmax.f32 %v389, %v410
      %v430 = vmax.f32 %v390, %v412
      %v431 = vmax.f32 %v391, %v414
      %v432 = vmax.f32 %v392, %v416
      %v433 = vld [vmem:[%s365] sm:$0x3]
      %v434 = vunpack.c.l.bf16 %v433
      %436 = vrot.lane.b32.xlu0 %v434, 96
      %v437 = vpop.permute.xlu0 %436
      %v439 = vmax.f32 %v434, %v437
      %vm440 = vcmask 254976
      %441 = vst.msk [vmem:[#allocation2] sm:$0x3] %vm440, %v439
      %vm442 = vcmask 261120
      %443 = vst.msk [vmem:[#allocation2 + $0x2] sm:$0xff] %vm442, %v425
      %444 = vst.msk [vmem:[#allocation2 + $0xa] sm:$0xff] %vm442, %v426
      %445 = vst.msk [vmem:[#allocation2 + $0x12] sm:$0xff] %vm442, %v427
      %446 = vst.msk [vmem:[#allocation2 + $0x1a] sm:$0xff] %vm442, %v428
      %447 = vst.msk [vmem:[#allocation2 + $0x22] sm:$0xff] %vm442, %v429
      %448 = vst.msk [vmem:[#allocation2 + $0x2a] sm:$0xff] %vm442, %v430
      %449 = vst.msk [vmem:[#allocation2 + $0x32] sm:$0xff] %vm442, %v431
      %450 = vst.msk [vmem:[#allocation2 + $0x3a] sm:$0xff] %vm442, %v432
      %vm451 = vcmask 257026
      %452 = vst.msk [vmem:[#allocation2 + $0x40] sm:$0xc] %vm451, %v439
      %v453 = vld [vmem:[#allocation2] sm:$0xff]
      %v454 = vld [vmem:[#allocation2 + $0x8] sm:$0xff]
      %v455 = vld [vmem:[#allocation2 + $0x10] sm:$0xff]
      %v456 = vld [vmem:[#allocation2 + $0x18] sm:$0xff]
      %v457 = vld [vmem:[#allocation2 + $0x20] sm:$0xff]
      %v458 = vld [vmem:[#allocation2 + $0x28] sm:$0xff]
      %v459 = vld [vmem:[#allocation2 + $0x30] sm:$0xff]
      %v460 = vld [vmem:[#allocation2 + $0x38] sm:$0xff]
      %v461 = vld [vmem:[#allocation2 + $0x40] sm:$0x3]
      %v462 = vpack.c.bf16 %v454, %v453
      %v463 = vpack.c.bf16 %v456, %v455
      %v464 = vpack.c.bf16 %v458, %v457
      %v465 = vpack.c.bf16 %v460, %v459
      %v466 = vpack.c.bf16 %v461, %v461
      %v467 = vld [vmem:[%s2] sm:$0xf]
      %v468 = vld [vmem:[%s2 + $0x4] sm:$0xf]
      %v469 = vld [vmem:[%s2 + $0x8] sm:$0xf]
      %v470 = vld [vmem:[%s2 + $0xc] sm:$0xf]
      %v471 = vld [vmem:[#allocation2 + $0x1] sm:$0xff]
      %v472 = vld [vmem:[#allocation2 + $0x9] sm:$0xff]
      %v473 = vld [vmem:[#allocation2 + $0x11] sm:$0xff]
      %v474 = vld [vmem:[#allocation2 + $0x19] sm:$0xff]
      %v475 = vld [vmem:[#allocation2 + $0x21] sm:$0xff]
      %v476 = vld [vmem:[#allocation2 + $0x29] sm:$0xff]
      %v477 = vld [vmem:[#allocation2 + $0x31] sm:$0xff]
      %v478 = vld [vmem:[#allocation2 + $0x39] sm:$0xff]
      %v479 = vld [vmem:[#allocation2 + $0x41] sm:$0x3]
      %v480 = vpack.c.bf16 %v472, %v471
      %v481 = vpack.c.bf16 %v474, %v473
      %v482 = vpack.c.bf16 %v476, %v475
      %v483 = vpack.c.bf16 %v478, %v477
      %v484 = vpack.c.bf16 %v479, %v479
      %s485 = scalar_lea.vmem %s2, 16
      %v486 = vld [vmem:[%s485] sm:$0xf]
      %v487 = vld [vmem:[%s485 + $0x4] sm:$0xf]
      %v488 = vld [vmem:[%s485 + $0x8] sm:$0xf]
      %v489 = vld [vmem:[%s485 + $0xc] sm:$0xf]
      %v494 = vunpack.c.l.b16 %v486
      %v495 = vunpack.c.l.b16 %v487
      %v496 = vunpack.c.l.b16 %v488
      %v497 = vunpack.c.l.b16 %v489
      %v498 = vpack.c.b16 %v495, %v494
      %v499 = vpack.c.b16 %v497, %v496
      %v503 = vsel %vm442, %v480, 0
      %v506 = vsel %vm442, %v481, 0
      %v509 = vsel %vm442, %v482, 0
      %v512 = vsel %vm442, %v483, 0
      %v515 = vsel %vm442, %v484, 0
      %517 = vmatprep.subr.bf16.mxu0 0
      %518 = vmatpush1.bf16.msra.mxu0 %v498
      %519 = vmatprep.subr.bf16.mxu0 0
      %520 = vmatpush1.bf16.msra.mxu0 %v499
      %521 = vmatprep.subr.bf16.mxu0 0
      %522 = vmatpush1.bf16.msra.mxu0 0
      %523 = vmatprep.subr.bf16.mxu0 0
      %524 = vmatpush1.bf16.msra.mxu0 0
      %525 = vmatprep.subr.bf16.mxu0 0
      %526 = vmatpush1.bf16.msra.mxu0 0
      %527 = vmatprep.subr.bf16.mxu0 0
      %528 = vmatpush1.bf16.msra.mxu0 0
      %529 = vmatprep.subr.bf16.mxu0 0
      %530 = vmatpush1.bf16.msra.mxu0 0
      %531 = vmatprep.subr.bf16.mxu0 0
      %532 = vmatpush1.bf16.msra.mxu0 0
      %533 = vmatprep.subr.bf16.mxu0 0
      %534 = vmatpush1.bf16.msra.mxu0 0
      %535 = vmatprep.subr.bf16.mxu0 0
      %536 = vmatpush1.bf16.msra.mxu0 0
      %537 = vmatprep.subr.bf16.mxu0 0
      %538 = vmatpush1.bf16.msra.mxu0 0
      %539 = vmatprep.subr.bf16.mxu0 0
      %540 = vmatpush1.bf16.msra.mxu0 0
      %541 = vmatprep.subr.bf16.mxu0 0
      %542 = vmatpush1.bf16.msra.mxu0 0
      %543 = vmatprep.subr.bf16.mxu0 0
      %544 = vmatpush1.bf16.msra.mxu0 0
      %545 = vmatprep.subr.bf16.mxu0 0
      %546 = vmatpush1.bf16.msra.mxu0 0
      %547 = vmatprep.subr.bf16.mxu0 0
      %548 = vmatpush1.bf16.msra.mxu0 0
      %549 = vmatprep.mubr.bf16.mxu0 0
      %550 = vmatmul.mubr.bf16.gmra.mrb[0].mxu0 %v503
      %v551 = vpop.f32.mrb[0].mxu0
      %v552 = vadd.f32 0.0, %v551
      %v553 = vpop.f32.mrb[0].mxu0
      %v554 = vpop.f32.mrb[0].mxu0
      %v555 = vadd.f32 0.0, %v554
      %v556 = vpop.f32.mrb[0].mxu0
      %557 = vmatprep.mubr.bf16.mxu0 0
      %558 = vmatmul.mubr.bf16.gmra.mrb[0].mxu0 %v506
      %v559 = vpop.f32.mrb[0].mxu0
      %v560 = vadd.f32 0.0, %v559
      %v561 = vpop.f32.mrb[0].mxu0
      %v562 = vpop.f32.mrb[0].mxu0
      %v563 = vadd.f32 0.0, %v562
      %v564 = vpop.f32.mrb[0].mxu0
      %565 = vmatprep.mubr.bf16.mxu0 0
      %566 = vmatmul.mubr.bf16.gmra.mrb[0].mxu0 %v509
      %v567 = vpop.f32.mrb[0].mxu0
      %v568 = vadd.f32 0.0, %v567
      %v569 = vpop.f32.mrb[0].mxu0
      %v570 = vpop.f32.mrb[0].mxu0
      %v571 = vadd.f32 0.0, %v570
      %v572 = vpop.f32.mrb[0].mxu0
      %573 = vmatprep.mubr.bf16.mxu0 0
      %574 = vmatmul.mubr.bf16.gmra.mrb[0].mxu0 %v512
      %v575 = vpop.f32.mrb[0].mxu0
      %v576 = vadd.f32 0.0, %v575
      %v577 = vpop.f32.mrb[0].mxu0
      %v578 = vpop.f32.mrb[0].mxu0
      %v579 = vadd.f32 0.0, %v578
      %v580 = vpop.f32.mrb[0].mxu0
      %581 = vmatprep.mubr.bf16.mxu0 0
      %582 = vmatmul.mubr.bf16.gmra.mrb[0].mxu0 %v515
      %v583 = vpop.f32.mrb[0].mxu0
      %v584 = vadd.f32 0.0, %v583
      %v585 = vpop.f32.mrb[0].mxu0
      %v586 = vpop.f32.mrb[0].mxu0
      %v587 = vpop.f32.mrb[0].mxu0
      %588 = vdwg.mxu0
      %v593 = vunpack.c.l.b16 %v467
      %v594 = vunpack.c.l.b16 %v468
      %v595 = vunpack.c.l.b16 %v469
      %v596 = vunpack.c.l.b16 %v470
      %v597 = vpack.c.b16 %v594, %v593
      %v598 = vpack.c.b16 %v596, %v595
      %v602 = vsel %vm442, %v462, 0
      %v605 = vsel %vm442, %v463, 0
      %v608 = vsel %vm442, %v464, 0
      %v611 = vsel %vm442, %v465, 0
      %v614 = vsel %vm442, %v466, 0
      %616 = vmatprep.subr.bf16.mxu0 0
      %617 = vmatpush1.bf16.msra.mxu0 %v597
      %618 = vmatprep.subr.bf16.mxu0 0
      %619 = vmatpush1.bf16.msra.mxu0 %v598
      %620 = vmatprep.subr.bf16.mxu0 0
      %621 = vmatpush1.bf16.msra.mxu0 0
      %622 = vmatprep.subr.bf16.mxu0 0
      %623 = vmatpush1.bf16.msra.mxu0 0
      %624 = vmatprep.subr.bf16.mxu0 0
      %625 = vmatpush1.bf16.msra.mxu0 0
      %626 = vmatprep.subr.bf16.mxu0 0
      %627 = vmatpush1.bf16.msra.mxu0 0
      %628 = vmatprep.subr.bf16.mxu0 0
      %629 = vmatpush1.bf16.msra.mxu0 0
      %630 = vmatprep.subr.bf16.mxu0 0
      %631 = vmatpush1.bf16.msra.mxu0 0
      %632 = vmatprep.subr.bf16.mxu0 0
      %633 = vmatpush1.bf16.msra.mxu0 0
      %634 = vmatprep.subr.bf16.mxu0 0
      %635 = vmatpush1.bf16.msra.mxu0 0
      %636 = vmatprep.subr.bf16.mxu0 0
      %637 = vmatpush1.bf16.msra.mxu0 0
      %638 = vmatprep.subr.bf16.mxu0 0
      %639 = vmatpush1.bf16.msra.mxu0 0
      %640 = vmatprep.subr.bf16.mxu0 0
      %641 = vmatpush1.bf16.msra.mxu0 0
      %642 = vmatprep.subr.bf16.mxu0 0
      %643 = vmatpush1.bf16.msra.mxu0 0
      %644 = vmatprep.subr.bf16.mxu0 0
      %645 = vmatpush1.bf16.msra.mxu0 0
      %646 = vmatprep.subr.bf16.mxu0 0
      %647 = vmatpush1.bf16.msra.mxu0 0
      %648 = vmatprep.mubr.bf16.mxu0 0
      %649 = vmatmul.mubr.bf16.gmra.mrb[0].mxu0 %v602
      %v650 = vpop.f32.mrb[0].mxu0
      %v651 = vadd.f32 %v552, %v650
      %v652 = vpop.f32.mrb[0].mxu0
      %v653 = vpop.f32.mrb[0].mxu0
      %v654 = vadd.f32 %v555, %v653
      %v655 = vpop.f32.mrb[0].mxu0
      %656 = vmatprep.mubr.bf16.mxu0 0
      %657 = vmatmul.mubr.bf16.gmra.mrb[0].mxu0 %v605
      %v658 = vpop.f32.mrb[0].mxu0
      %v659 = vadd.f32 %v560, %v658
      %v660 = vpop.f32.mrb[0].mxu0
      %v661 = vpop.f32.mrb[0].mxu0
      %v662 = vadd.f32 %v563, %v661
      %v663 = vpop.f32.mrb[0].mxu0
      %664 = vmatprep.mubr.bf16.mxu0 0
      %665 = vmatmul.mubr.bf16.gmra.mrb[0].mxu0 %v608
      %v666 = vpop.f32.mrb[0].mxu0
      %v667 = vadd.f32 %v568, %v666
      %v668 = vpop.f32.mrb[0].mxu0
      %v669 = vpop.f32.mrb[0].mxu0
      %v670 = vadd.f32 %v571, %v669
      %v671 = vpop.f32.mrb[0].mxu0
      %672 = vmatprep.mubr.bf16.mxu0 0
      %673 = vmatmul.mubr.bf16.gmra.mrb[0].mxu0 %v611
      %v674 = vpop.f32.mrb[0].mxu0
      %v675 = vadd.f32 %v576, %v674
      %v676 = vpop.f32.mrb[0].mxu0
      %v677 = vpop.f32.mrb[0].mxu0
      %v678 = vadd.f32 %v579, %v677
      %v679 = vpop.f32.mrb[0].mxu0
      %680 = vmatprep.mubr.bf16.mxu0 0
      %681 = vmatmul.mubr.bf16.gmra.mrb[0].mxu0 %v614
      %v682 = vpop.f32.mrb[0].mxu0
      %v683 = vadd.f32 %v584, %v682
      %v684 = vpop.f32.mrb[0].mxu0
      %v685 = vpop.f32.mrb[0].mxu0
      %v686 = vpop.f32.mrb[0].mxu0
      %687 = vdwg.mxu0
      %v688 = vld [vmem:[#allocation2 + $0x2] sm:$0xff]
      %v689 = vld [vmem:[#allocation2 + $0xa] sm:$0xff]
      %v690 = vld [vmem:[#allocation2 + $0x12] sm:$0xff]
      %v691 = vld [vmem:[#allocation2 + $0x1a] sm:$0xff]
      %v692 = vld [vmem:[#allocation2 + $0x22] sm:$0xff]
      %v693 = vld [vmem:[#allocation2 + $0x2a] sm:$0xff]
      %v694 = vld [vmem:[#allocation2 + $0x32] sm:$0xff]
      %v695 = vld [vmem:[#allocation2 + $0x3a] sm:$0xff]
      %v696 = vld [vmem:[#allocation2 + $0x42] sm:$0x3]
      %v697 = vpack.c.bf16 %v689, %v688
      %v698 = vpack.c.bf16 %v691, %v690
      %v699 = vpack.c.bf16 %v693, %v692
      %v700 = vpack.c.bf16 %v695, %v694
      %v701 = vpack.c.bf16 %v696, %v696
      %s702 = scalar_lea.vmem %s2, 32
      %v703 = vld [vmem:[%s702] sm:$0xf]
      %v704 = vld [vmem:[%s702 + $0x4] sm:$0xf]
      %v705 = vld [vmem:[%s702 + $0x8] sm:$0xf]
      %v706 = vld [vmem:[%s702 + $0xc] sm:$0xf]
      %v711 = vunpack.c.l.b16 %v703
      %v712 = vunpack.c.l.b16 %v704
      %v713 = vunpack.c.l.b16 %v705
      %v714 = vunpack.c.l.b16 %v706
      %v715 = vpack.c.b16 %v712, %v711
      %v716 = vpack.c.b16 %v714, %v713
      %v720 = vsel %vm442, %v697, 0
      %v723 = vsel %vm442, %v698, 0
      %v726 = vsel %vm442, %v699, 0
      %v729 = vsel %vm442, %v700, 0
      %v732 = vsel %vm442, %v701, 0
      %734 = vmatprep.subr.bf16.mxu0 0
      %735 = vmatpush1.bf16.msra.mxu0 %v715
      %736 = vmatprep.subr.bf16.mxu0 0
      %737 = vmatpush1.bf16.msra.mxu0 %v716
      %738 = vmatprep.subr.bf16.mxu0 0
      %739 = vmatpush1.bf16.msra.mxu0 0
      %740 = vmatprep.subr.bf16.mxu0 0
      %741 = vmatpush1.bf16.msra.mxu0 0
      %742 = vmatprep.subr.bf16.mxu0 0
      %743 = vmatpush1.bf16.msra.mxu0 0
      %744 = vmatprep.subr.bf16.mxu0 0
      %745 = vmatpush1.bf16.msra.mxu0 0
      %746 = vmatprep.subr.bf16.mxu0 0
      %747 = vmatpush1.bf16.msra.mxu0 0
      %748 = vmatprep.subr.bf16.mxu0 0
      %749 = vmatpush1.bf16.msra.mxu0 0
      %750 = vmatprep.subr.bf16.mxu0 0
      %751 = vmatpush1.bf16.msra.mxu0 0
      %752 = vmatprep.subr.bf16.mxu0 0
      %753 = vmatpush1.bf16.msra.mxu0 0
      %754 = vmatprep.subr.bf16.mxu0 0
      %755 = vmatpush1.bf16.msra.mxu0 0
      %756 = vmatprep.subr.bf16.mxu0 0
      %757 = vmatpush1.bf16.msra.mxu0 0
      %758 = vmatprep.subr.bf16.mxu0 0
      %759 = vmatpush1.bf16.msra.mxu0 0
      %760 = vmatprep.subr.bf16.mxu0 0
      %761 = vmatpush1.bf16.msra.mxu0 0
      %762 = vmatprep.subr.bf16.mxu0 0
      %763 = vmatpush1.bf16.msra.mxu0 0
      %764 = vmatprep.subr.bf16.mxu0 0
      %765 = vmatpush1.bf16.msra.mxu0 0
      %766 = vmatprep.mubr.bf16.mxu0 0
      %767 = vmatmul.mubr.bf16.gmra.mrb[0].mxu0 %v720
      %v768 = vpop.f32.mrb[0].mxu0
      %v769 = vadd.f32 0.0, %v768
      %v770 = vpop.f32.mrb[0].mxu0
      %v771 = vpop.f32.mrb[0].mxu0
      %v772 = vadd.f32 0.0, %v771
      %v773 = vpop.f32.mrb[0].mxu0
      %774 = vmatprep.mubr.bf16.mxu0 0
      %775 = vmatmul.mubr.bf16.gmra.mrb[0].mxu0 %v723
      %v776 = vpop.f32.mrb[0].mxu0
      %v777 = vadd.f32 0.0, %v776
      %v778 = vpop.f32.mrb[0].mxu0
      %v779 = vpop.f32.mrb[0].mxu0
      %v780 = vadd.f32 0.0, %v779
      %v781 = vpop.f32.mrb[0].mxu0
      %782 = vmatprep.mubr.bf16.mxu0 0
      %783 = vmatmul.mubr.bf16.gmra.mrb[0].mxu0 %v726
      %v784 = vpop.f32.mrb[0].mxu0
      %v785 = vadd.f32 0.0, %v784
      %v786 = vpop.f32.mrb[0].mxu0
      %v787 = vpop.f32.mrb[0].mxu0
      %v788 = vadd.f32 0.0, %v787
      %v789 = vpop.f32.mrb[0].mxu0
      %790 = vmatprep.mubr.bf16.mxu0 0
      %791 = vmatmul.mubr.bf16.gmra.mrb[0].mxu0 %v729
      %v792 = vpop.f32.mrb[0].mxu0
      %v793 = vadd.f32 0.0, %v792
      %v794 = vpop.f32.mrb[0].mxu0
      %v795 = vpop.f32.mrb[0].mxu0
      %v796 = vadd.f32 0.0, %v795
      %v797 = vpop.f32.mrb[0].mxu0
      %798 = vmatprep.mubr.bf16.mxu0 0
      %799 = vmatmul.mubr.bf16.gmra.mrb[0].mxu0 %v732
      %v800 = vpop.f32.mrb[0].mxu0
      %v801 = vadd.f32 0.0, %v800
      %v802 = vpop.f32.mrb[0].mxu0
      %v803 = vpop.f32.mrb[0].mxu0
      %v804 = vpop.f32.mrb[0].mxu0
      %805 = vdwg.mxu0
      %v806 = vadd.f32 %v651, %v769
      %v807 = vadd.f32 %v654, %v772
      %v808 = vadd.f32 %v659, %v777
      %v809 = vadd.f32 %v662, %v780
      %v810 = vadd.f32 %v667, %v785
      %v811 = vadd.f32 %v670, %v788
      %v812 = vadd.f32 %v675, %v793
      %v813 = vadd.f32 %v678, %v796
      %v814 = vadd.f32 %v683, %v801
      %v815 = vld [vmem:[%s4] sm:$0x1]
      %v817 = vlaneseq
      %v818 = vshrl.u32 %v817, 7
      %v819 = vsub.s32 0, %v818
      %v820 = vrot.slane %v815, %v819
      %v822 = vmul.f32 %v806, %v820
      %v823 = vmul.f32 %v807, %v820
      %v824 = vmul.f32 %v808, %v820
      %v825 = vmul.f32 %v809, %v820
      %v826 = vmul.f32 %v810, %v820
      %v827 = vmul.f32 %v811, %v820
      %v828 = vmul.f32 %v812, %v820
      %v829 = vmul.f32 %v813, %v820
      %v830 = vmul.f32 %v814, %v820
      %v831 = vld [vmem:[%s5] sm:$0x1]
      %v833 = vlaneseq
      %v834 = vshrl.u32 %v833, 7
      %v835 = vsub.s32 0, %v834
      %v836 = vrot.slane %v831, %v835
      %v838 = vadd.f32 %v822, %v836
      %v839 = vadd.f32 %v823, %v836
      %v840 = vadd.f32 %v824, %v836
      %v841 = vadd.f32 %v825, %v836
      %v842 = vadd.f32 %v826, %v836
      %v843 = vadd.f32 %v827, %v836
      %v844 = vadd.f32 %v828, %v836
      %v845 = vadd.f32 %v829, %v836
      %v846 = vadd.f32 %v830, %v836
      %v847 = vmax.f32 %v838, 0.0
      %v848 = vmax.f32 %v839, 0.0
      %v849 = vmax.f32 %v840, 0.0
      %v850 = vmax.f32 %v841, 0.0
      %v851 = vmax.f32 %v842, 0.0
      %v852 = vmax.f32 %v843, 0.0
      %v853 = vmax.f32 %v844, 0.0
      %v854 = vmax.f32 %v845, 0.0
      %v855 = vmax.f32 %v846, 0.0
      %vm856 = vcmask 523264
      %857 = vst.msk [vmem:[#allocation3] sm:$0xff] %vm856, %v847
      %858 = vst.msk [vmem:[#allocation3 + $0x8] sm:$0xff] %vm856, %v848
      %859 = vst.msk [vmem:[#allocation3 + $0x10] sm:$0xff] %vm856, %v849
      %860 = vst.msk [vmem:[#allocation3 + $0x18] sm:$0xff] %vm856, %v850
      %861 = vst.msk [vmem:[#allocation3 + $0x20] sm:$0xff] %vm856, %v851
      %862 = vst.msk [vmem:[#allocation3 + $0x28] sm:$0xff] %vm856, %v852
      %863 = vst.msk [vmem:[#allocation3 + $0x30] sm:$0xff] %vm856, %v853
      %864 = vst.msk [vmem:[#allocation3 + $0x38] sm:$0xff] %vm856, %v854
      %vm865 = vcmask 517120
      %866 = vst.msk [vmem:[#allocation3 + $0x40] sm:$0x3] %vm865, %v855
      %p867 = scmp.eq.s32.totalorder %s24, 0
      // Predicated region
      $region53: #{down1d_forward.1} parent=51 // pred_check
        %p868 = pneg %p867
      $region54: #{down1d_forward.1} parent=51 // pred_check_branch
        %870 = sbr.rel (%p868) target = $region56
      $region55: #{down1d_forward.1} parent=51 // pred_region
        %v871 = vld [vmem:[#allocation3 + $0x2] sm:$0x1]
        %vm872 = vcmask 516096
        %873 = vst.msk [vmem:[#allocation3] sm:$0x1] %vm872, %v871
      $region56: #{down1d_forward.1} parent=51 // pred_fallthru
        _
      %p874 = scmp.eq.s32.totalorder %s24, 1
      // Predicated region
      $region57: #{down1d_forward.1} parent=51 // pred_check
        %p875 = pneg %p874
      $region58: #{down1d_forward.1} parent=51 // pred_check_branch
        %877 = sbr.rel (%p875) target = $region60
      $region59: #{down1d_forward.1} parent=51 // pred_region
        %v878 = vld [vmem:[#allocation3 + $0x3f] sm:$0x1]
        %vm879 = vcmask 516096
        %880 = vst.msk [vmem:[#allocation3 + $0x41] sm:$0x1] %vm879, %v878
      $region60: #{down1d_forward.1} parent=51 // pred_fallthru
        _
      %v881 = vld [vmem:[#allocation3] sm:$0xff]
      %v882 = vld [vmem:[#allocation3 + $0x8] sm:$0xff]
      %v883 = vld [vmem:[#allocation3 + $0x10] sm:$0xff]
      %v884 = vld [vmem:[#allocation3 + $0x18] sm:$0xff]
      %v885 = vld [vmem:[#allocation3 + $0x20] sm:$0xff]
      %v886 = vld [vmem:[#allocation3 + $0x28] sm:$0xff]
      %v887 = vld [vmem:[#allocation3 + $0x30] sm:$0xff]
      %v888 = vld [vmem:[#allocation3 + $0x38] sm:$0xff]
      %v889 = vpack.c.bf16 %v882, %v881
      %v890 = vpack.c.bf16 %v884, %v883
      %v891 = vpack.c.bf16 %v886, %v885
      %v892 = vpack.c.bf16 %v888, %v887
      %v893 = vld [vmem:[%s3] sm:$0xf]
      %v894 = vld [vmem:[%s3 + $0x4] sm:$0xf]
      %v895 = vld [vmem:[%s3 + $0x8] sm:$0xf]
      %v896 = vld [vmem:[%s3 + $0xc] sm:$0xf]
      %v897 = vld [vmem:[%s3 + $0x10] sm:$0xf]
      %v898 = vld [vmem:[%s3 + $0x14] sm:$0xf]
      %v899 = vld [vmem:[%s3 + $0x18] sm:$0xf]
      %v900 = vld [vmem:[%s3 + $0x1c] sm:$0xf]
      %v901 = vld [vmem:[#allocation3 + $0x1] sm:$0xff]
      %v902 = vld [vmem:[#allocation3 + $0x9] sm:$0xff]
      %v903 = vld [vmem:[#allocation3 + $0x11] sm:$0xff]
      %v904 = vld [vmem:[#allocation3 + $0x19] sm:$0xff]
      %v905 = vld [vmem:[#allocation3 + $0x21] sm:$0xff]
      %v906 = vld [vmem:[#allocation3 + $0x29] sm:$0xff]
      %v907 = vld [vmem:[#allocation3 + $0x31] sm:$0xff]
      %v908 = vld [vmem:[#allocation3 + $0x39] sm:$0xff]
      %v909 = vpack.c.bf16 %v902, %v901
      %v910 = vpack.c.bf16 %v904, %v903
      %v911 = vpack.c.bf16 %v906, %v905
      %v912 = vpack.c.bf16 %v908, %v907
      %s913 = scalar_lea.vmem %s3, 32
      %v914 = vld [vmem:[%s913] sm:$0xf]
      %v915 = vld [vmem:[%s913 + $0x4] sm:$0xf]
      %v916 = vld [vmem:[%s913 + $0x8] sm:$0xf]
      %v917 = vld [vmem:[%s913 + $0xc] sm:$0xf]
      %v918 = vld [vmem:[%s913 + $0x10] sm:$0xf]
      %v919 = vld [vmem:[%s913 + $0x14] sm:$0xf]
      %v920 = vld [vmem:[%s913 + $0x18] sm:$0xf]
      %v921 = vld [vmem:[%s913 + $0x1c] sm:$0xf]
      %v930 = vunpack.c.l.b16 %v914
      %v931 = vunpack.c.l.b16 %v915
      %v932 = vunpack.c.l.b16 %v916
      %v933 = vunpack.c.l.b16 %v917
      %v934 = vunpack.c.l.b16 %v918
      %v935 = vunpack.c.l.b16 %v919
      %v936 = vunpack.c.l.b16 %v920
      %v937 = vunpack.c.l.b16 %v921
      %v938 = vpack.c.b16 %v931, %v930
      %v939 = vpack.c.b16 %v933, %v932
      %v940 = vpack.c.b16 %v935, %v934
      %v941 = vpack.c.b16 %v937, %v936
      %v947 = vsel %vm856, %v909, 0
      %v950 = vsel %vm856, %v910, 0
      %v953 = vsel %vm856, %v911, 0
      %v956 = vsel %vm856, %v912, 0
      %958 = vmatprep.subr.bf16.mxu0 0
      %959 = vmatpush1.bf16.msra.mxu0 %v938
      %960 = vmatprep.subr.bf16.mxu0 0
      %961 = vmatpush1.bf16.msra.mxu0 %v939
      %962 = vmatprep.subr.bf16.mxu0 0
      %963 = vmatpush1.bf16.msra.mxu0 %v940
      %964 = vmatprep.subr.bf16.mxu0 0
      %965 = vmatpush1.bf16.msra.mxu0 %v941
      %966 = vmatprep.subr.bf16.mxu0 0
      %967 = vmatpush1.bf16.msra.mxu0 0
      %968 = vmatprep.subr.bf16.mxu0 0
      %969 = vmatpush1.bf16.msra.mxu0 0
      %970 = vmatprep.subr.bf16.mxu0 0
      %971 = vmatpush1.bf16.msra.mxu0 0
      %972 = vmatprep.subr.bf16.mxu0 0
      %973 = vmatpush1.bf16.msra.mxu0 0
      %974 = vmatprep.subr.bf16.mxu0 0
      %975 = vmatpush1.bf16.msra.mxu0 0
      %976 = vmatprep.subr.bf16.mxu0 0
      %977 = vmatpush1.bf16.msra.mxu0 0
      %978 = vmatprep.subr.bf16.mxu0 0
      %979 = vmatpush1.bf16.msra.mxu0 0
      %980 = vmatprep.subr.bf16.mxu0 0
      %981 = vmatpush1.bf16.msra.mxu0 0
      %982 = vmatprep.subr.bf16.mxu0 0
      %983 = vmatpush1.bf16.msra.mxu0 0
      %984 = vmatprep.subr.bf16.mxu0 0
      %985 = vmatpush1.bf16.msra.mxu0 0
      %986 = vmatprep.subr.bf16.mxu0 0
      %987 = vmatpush1.bf16.msra.mxu0 0
      %988 = vmatprep.subr.bf16.mxu0 0
      %989 = vmatpush1.bf16.msra.mxu0 0
      %990 = vmatprep.mubr.bf16.mxu0 0
      %991 = vmatmul.mubr.bf16.gmra.mrb[0].mxu0 %v947
      %v992 = vpop.f32.mrb[0].mxu0
      %v993 = vadd.f32 0.0, %v992
      %v994 = vpop.f32.mrb[0].mxu0
      %v995 = vpop.f32.mrb[0].mxu0
      %v996 = vadd.f32 0.0, %v995
      %v997 = vpop.f32.mrb[0].mxu0
      %998 = vmatprep.mubr.bf16.mxu0 0
      %999 = vmatmul.mubr.bf16.gmra.mrb[0].mxu0 %v950
      %v1000 = vpop.f32.mrb[0].mxu0
      %v1001 = vadd.f32 0.0, %v1000
      %v1002 = vpop.f32.mrb[0].mxu0
      %v1003 = vpop.f32.mrb[0].mxu0
      %v1004 = vadd.f32 0.0, %v1003
      %v1005 = vpop.f32.mrb[0].mxu0
      %1006 = vmatprep.mubr.bf16.mxu0 0
      %1007 = vmatmul.mubr.bf16.gmra.mrb[0].mxu0 %v953
      %v1008 = vpop.f32.mrb[0].mxu0
      %v1009 = vadd.f32 0.0, %v1008
      %v1010 = vpop.f32.mrb[0].mxu0
      %v1011 = vpop.f32.mrb[0].mxu0
      %v1012 = vadd.f32 0.0, %v1011
      %v1013 = vpop.f32.mrb[0].mxu0
      %1014 = vmatprep.mubr.bf16.mxu0 0
      %1015 = vmatmul.mubr.bf16.gmra.mrb[0].mxu0 %v956
      %v1016 = vpop.f32.mrb[0].mxu0
      %v1017 = vadd.f32 0.0, %v1016
      %v1018 = vpop.f32.mrb[0].mxu0
      %v1019 = vpop.f32.mrb[0].mxu0
      %v1020 = vadd.f32 0.0, %v1019
      %v1021 = vpop.f32.mrb[0].mxu0
      %1022 = vdwg.mxu0
      %v1031 = vunpack.c.l.b16 %v893
      %v1032 = vunpack.c.l.b16 %v894
      %v1033 = vunpack.c.l.b16 %v895
      %v1034 = vunpack.c.l.b16 %v896
      %v1035 = vunpack.c.l.b16 %v897
      %v1036 = vunpack.c.l.b16 %v898
      %v1037 = vunpack.c.l.b16 %v899
      %v1038 = vunpack.c.l.b16 %v900
      %v1039 = vpack.c.b16 %v1032, %v1031
      %v1040 = vpack.c.b16 %v1034, %v1033
      %v1041 = vpack.c.b16 %v1036, %v1035
      %v1042 = vpack.c.b16 %v1038, %v1037
      %v1048 = vsel %vm856, %v889, 0
      %v1051 = vsel %vm856, %v890, 0
      %v1054 = vsel %vm856, %v891, 0
      %v1057 = vsel %vm856, %v892, 0
      %1059 = vmatprep.subr.bf16.mxu0 0
      %1060 = vmatpush1.bf16.msra.mxu0 %v1039
      %1061 = vmatprep.subr.bf16.mxu0 0
      %1062 = vmatpush1.bf16.msra.mxu0 %v1040
      %1063 = vmatprep.subr.bf16.mxu0 0
      %1064 = vmatpush1.bf16.msra.mxu0 %v1041
      %1065 = vmatprep.subr.bf16.mxu0 0
      %1066 = vmatpush1.bf16.msra.mxu0 %v1042
      %1067 = vmatprep.subr.bf16.mxu0 0
      %1068 = vmatpush1.bf16.msra.mxu0 0
      %1069 = vmatprep.subr.bf16.mxu0 0
      %1070 = vmatpush1.bf16.msra.mxu0 0
      %1071 = vmatprep.subr.bf16.mxu0 0
      %1072 = vmatpush1.bf16.msra.mxu0 0
      %1073 = vmatprep.subr.bf16.mxu0 0
      %1074 = vmatpush1.bf16.msra.mxu0 0
      %1075 = vmatprep.subr.bf16.mxu0 0
      %1076 = vmatpush1.bf16.msra.mxu0 0
      %1077 = vmatprep.subr.bf16.mxu0 0
      %1078 = vmatpush1.bf16.msra.mxu0 0
      %1079 = vmatprep.subr.bf16.mxu0 0
      %1080 = vmatpush1.bf16.msra.mxu0 0
      %1081 = vmatprep.subr.bf16.mxu0 0
      %1082 = vmatpush1.bf16.msra.mxu0 0
      %1083 = vmatprep.subr.bf16.mxu0 0
      %1084 = vmatpush1.bf16.msra.mxu0 0
      %1085 = vmatprep.subr.bf16.mxu0 0
      %1086 = vmatpush1.bf16.msra.mxu0 0
      %1087 = vmatprep.subr.bf16.mxu0 0
      %1088 = vmatpush1.bf16.msra.mxu0 0
      %1089 = vmatprep.subr.bf16.mxu0 0
      %1090 = vmatpush1.bf16.msra.mxu0 0
      %1091 = vmatprep.mubr.bf16.mxu0 0
      %1092 = vmatmul.mubr.bf16.gmra.mrb[0].mxu0 %v1048
      %v1093 = vpop.f32.mrb[0].mxu0
      %v1094 = vadd.f32 %v993, %v1093
      %v1095 = vpop.f32.mrb[0].mxu0
      %v1096 = vpop.f32.mrb[0].mxu0
      %v1097 = vadd.f32 %v996, %v1096
      %v1098 = vpop.f32.mrb[0].mxu0
      %1099 = vmatprep.mubr.bf16.mxu0 0
      %1100 = vmatmul.mubr.bf16.gmra.mrb[0].mxu0 %v1051
      %v1101 = vpop.f32.mrb[0].mxu0
      %v1102 = vadd.f32 %v1001, %v1101
      %v1103 = vpop.f32.mrb[0].mxu0
      %v1104 = vpop.f32.mrb[0].mxu0
      %v1105 = vadd.f32 %v1004, %v1104
      %v1106 = vpop.f32.mrb[0].mxu0
      %1107 = vmatprep.mubr.bf16.mxu0 0
      %1108 = vmatmul.mubr.bf16.gmra.mrb[0].mxu0 %v1054
      %v1109 = vpop.f32.mrb[0].mxu0
      %v1110 = vadd.f32 %v1009, %v1109
      %v1111 = vpop.f32.mrb[0].mxu0
      %v1112 = vpop.f32.mrb[0].mxu0
      %v1113 = vadd.f32 %v1012, %v1112
      %v1114 = vpop.f32.mrb[0].mxu0
      %1115 = vmatprep.mubr.bf16.mxu0 0
      %1116 = vmatmul.mubr.bf16.gmra.mrb[0].mxu0 %v1057
      %v1117 = vpop.f32.mrb[0].mxu0
      %v1118 = vadd.f32 %v1017, %v1117
      %v1119 = vpop.f32.mrb[0].mxu0
      %v1120 = vpop.f32.mrb[0].mxu0
      %v1121 = vadd.f32 %v1020, %v1120
      %v1122 = vpop.f32.mrb[0].mxu0
      %1123 = vdwg.mxu0
      %v1124 = vld [vmem:[#allocation3 + $0x2] sm:$0xff]
      %v1125 = vld [vmem:[#allocation3 + $0xa] sm:$0xff]
      %v1126 = vld [vmem:[#allocation3 + $0x12] sm:$0xff]
      %v1127 = vld [vmem:[#allocation3 + $0x1a] sm:$0xff]
      %v1128 = vld [vmem:[#allocation3 + $0x22] sm:$0xff]
      %v1129 = vld [vmem:[#allocation3 + $0x2a] sm:$0xff]
      %v1130 = vld [vmem:[#allocation3 + $0x32] sm:$0xff]
      %v1131 = vld [vmem:[#allocation3 + $0x3a] sm:$0xff]
      %v1132 = vpack.c.bf16 %v1125, %v1124
      %v1133 = vpack.c.bf16 %v1127, %v1126
      %v1134 = vpack.c.bf16 %v1129, %v1128
      %v1135 = vpack.c.bf16 %v1131, %v1130
      %s1136 = scalar_lea.vmem %s3, 64
      %v1137 = vld [vmem:[%s1136] sm:$0xf]
      %v1138 = vld [vmem:[%s1136 + $0x4] sm:$0xf]
      %v1139 = vld [vmem:[%s1136 + $0x8] sm:$0xf]
      %v1140 = vld [vmem:[%s1136 + $0xc] sm:$0xf]
      %v1141 = vld [vmem:[%s1136 + $0x10] sm:$0xf]
      %v1142 = vld [vmem:[%s1136 + $0x14] sm:$0xf]
      %v1143 = vld [vmem:[%s1136 + $0x18] sm:$0xf]
      %v1144 = vld [vmem:[%s1136 + $0x1c] sm:$0xf]
      %v1153 = vunpack.c.l.b16 %v1137
      %v1154 = vunpack.c.l.b16 %v1138
      %v1155 = vunpack.c.l.b16 %v1139
      %v1156 = vunpack.c.l.b16 %v1140
      %v1157 = vunpack.c.l.b16 %v1141
      %v1158 = vunpack.c.l.b16 %v1142
      %v1159 = vunpack.c.l.b16 %v1143
      %v1160 = vunpack.c.l.b16 %v1144
      %v1161 = vpack.c.b16 %v1154, %v1153
      %v1162 = vpack.c.b16 %v1156, %v1155
      %v1163 = vpack.c.b16 %v1158, %v1157
      %v1164 = vpack.c.b16 %v1160, %v1159
      %v1170 = vsel %vm856, %v1132, 0
      %v1173 = vsel %vm856, %v1133, 0
      %v1176 = vsel %vm856, %v1134, 0
      %v1179 = vsel %vm856, %v1135, 0
      %1181 = vmatprep.subr.bf16.mxu0 0
      %1182 = vmatpush1.bf16.msra.mxu0 %v1161
      %1183 = vmatprep.subr.bf16.mxu0 0
      %1184 = vmatpush1.bf16.msra.mxu0 %v1162
      %1185 = vmatprep.subr.bf16.mxu0 0
      %1186 = vmatpush1.bf16.msra.mxu0 %v1163
      %1187 = vmatprep.subr.bf16.mxu0 0
      %1188 = vmatpush1.bf16.msra.mxu0 %v1164
      %1189 = vmatprep.subr.bf16.mxu0 0
      %1190 = vmatpush1.bf16.msra.mxu0 0
      %1191 = vmatprep.subr.bf16.mxu0 0
      %1192 = vmatpush1.bf16.msra.mxu0 0
      %1193 = vmatprep.subr.bf16.mxu0 0
      %1194 = vmatpush1.bf16.msra.mxu0 0
      %1195 = vmatprep.subr.bf16.mxu0 0
      %1196 = vmatpush1.bf16.msra.mxu0 0
      %1197 = vmatprep.subr.bf16.mxu0 0
      %1198 = vmatpush1.bf16.msra.mxu0 0
      %1199 = vmatprep.subr.bf16.mxu0 0
      %1200 = vmatpush1.bf16.msra.mxu0 0
      %1201 = vmatprep.subr.bf16.mxu0 0
      %1202 = vmatpush1.bf16.msra.mxu0 0
      %1203 = vmatprep.subr.bf16.mxu0 0
      %1204 = vmatpush1.bf16.msra.mxu0 0
      %1205 = vmatprep.subr.bf16.mxu0 0
      %1206 = vmatpush1.bf16.msra.mxu0 0
      %1207 = vmatprep.subr.bf16.mxu0 0
      %1208 = vmatpush1.bf16.msra.mxu0 0
      %1209 = vmatprep.subr.bf16.mxu0 0
      %1210 = vmatpush1.bf16.msra.mxu0 0
      %1211 = vmatprep.subr.bf16.mxu0 0
      %1212 = vmatpush1.bf16.msra.mxu0 0
      %1213 = vmatprep.mubr.bf16.mxu0 0
      %1214 = vmatmul.mubr.bf16.gmra.mrb[0].mxu0 %v1170
      %v1215 = vpop.f32.mrb[0].mxu0
      %v1216 = vadd.f32 0.0, %v1215
      %v1217 = vpop.f32.mrb[0].mxu0
      %v1218 = vpop.f32.mrb[0].mxu0
      %v1219 = vadd.f32 0.0, %v1218
      %v1220 = vpop.f32.mrb[0].mxu0
      %1221 = vmatprep.mubr.bf16.mxu0 0
      %1222 = vmatmul.mubr.bf16.gmra.mrb[0].mxu0 %v1173
      %v1223 = vpop.f32.mrb[0].mxu0
      %v1224 = vadd.f32 0.0, %v1223
      %v1225 = vpop.f32.mrb[0].mxu0
      %v1226 = vpop.f32.mrb[0].mxu0
      %v1227 = vadd.f32 0.0, %v1226
      %v1228 = vpop.f32.mrb[0].mxu0
      %1229 = vmatprep.mubr.bf16.mxu0 0
      %1230 = vmatmul.mubr.bf16.gmra.mrb[0].mxu0 %v1176
      %v1231 = vpop.f32.mrb[0].mxu0
      %v1232 = vadd.f32 0.0, %v1231
      %v1233 = vpop.f32.mrb[0].mxu0
      %v1234 = vpop.f32.mrb[0].mxu0
      %v1235 = vadd.f32 0.0, %v1234
      %v1236 = vpop.f32.mrb[0].mxu0
      %1237 = vmatprep.mubr.bf16.mxu0 0
      %1238 = vmatmul.mubr.bf16.gmra.mrb[0].mxu0 %v1179
      %v1239 = vpop.f32.mrb[0].mxu0
      %v1240 = vadd.f32 0.0, %v1239
      %v1241 = vpop.f32.mrb[0].mxu0
      %v1242 = vpop.f32.mrb[0].mxu0
      %v1243 = vadd.f32 0.0, %v1242
      %v1244 = vpop.f32.mrb[0].mxu0
      %1245 = vdwg.mxu0
      %v1246 = vadd.f32 %v1094, %v1216
      %v1247 = vadd.f32 %v1097, %v1219
      %v1248 = vadd.f32 %v1102, %v1224
      %v1249 = vadd.f32 %v1105, %v1227
      %v1250 = vadd.f32 %v1110, %v1232
      %v1251 = vadd.f32 %v1113, %v1235
      %v1252 = vadd.f32 %v1118, %v1240
      %v1253 = vadd.f32 %v1121, %v1243
      %v1254 = vld [vmem:[%s6] sm:$0x1]
      %v1256 = vlaneseq
      %v1257 = vshrl.u32 %v1256, 7
      %v1258 = vsub.s32 0, %v1257
      %v1259 = vrot.slane %v1254, %v1258
      %v1261 = vmul.f32 %v1246, %v1259
      %v1262 = vmul.f32 %v1247, %v1259
      %v1263 = vmul.f32 %v1248, %v1259
      %v1264 = vmul.f32 %v1249, %v1259
      %v1265 = vmul.f32 %v1250, %v1259
      %v1266 = vmul.f32 %v1251, %v1259
      %v1267 = vmul.f32 %v1252, %v1259
      %v1268 = vmul.f32 %v1253, %v1259
      %v1269 = vld [vmem:[%s7] sm:$0x1]
      %v1271 = vlaneseq
      %v1272 = vshrl.u32 %v1271, 7
      %v1273 = vsub.s32 0, %v1272
      %v1274 = vrot.slane %v1269, %v1273
      %v1276 = vadd.f32 %v1261, %v1274
      %v1277 = vadd.f32 %v1262, %v1274
      %v1278 = vadd.f32 %v1263, %v1274
      %v1279 = vadd.f32 %v1264, %v1274
      %v1280 = vadd.f32 %v1265, %v1274
      %v1281 = vadd.f32 %v1266, %v1274
      %v1282 = vadd.f32 %v1267, %v1274
      %v1283 = vadd.f32 %v1268, %v1274
      %v1284 = vmax.f32 %v1276, 0.0
      %v1285 = vmax.f32 %v1277, 0.0
      %v1286 = vmax.f32 %v1278, 0.0
      %v1287 = vmax.f32 %v1279, 0.0
      %v1288 = vmax.f32 %v1280, 0.0
      %v1289 = vmax.f32 %v1281, 0.0
      %v1290 = vmax.f32 %v1282, 0.0
      %v1291 = vmax.f32 %v1283, 0.0
      %1292 = vst.msk [vmem:[%s374] sm:$0xff] %vm856, %v1284
      %1293 = vst.msk [vmem:[%s374 + $0x8] sm:$0xff] %vm856, %v1285
      %1294 = vst.msk [vmem:[%s374 + $0x10] sm:$0xff] %vm856, %v1286
      %1295 = vst.msk [vmem:[%s374 + $0x18] sm:$0xff] %vm856, %v1287
      %1296 = vst.msk [vmem:[%s374 + $0x20] sm:$0xff] %vm856, %v1288
      %1297 = vst.msk [vmem:[%s374 + $0x28] sm:$0xff] %vm856, %v1289
      %1298 = vst.msk [vmem:[%s374 + $0x30] sm:$0xff] %vm856, %v1290
      %1299 = vst.msk [vmem:[%s374 + $0x38] sm:$0xff] %vm856, %v1291
      %s1300 = smul.u32 8, %s24
      %p1301 = scmp.lt.s32.totalorder %s23, 1
      %s1302 = scalar_select %p1301, %s23, 1
      %p1303 = scmp.lt.s32.totalorder %s1300, 15
      %s1304 = scalar_select %p1303, %s1300, 15
      %s1305 = smul.addr %s1302, 16
      %s1306 = sadd.s32 %s1304, %s1305
      %s1307 = smul.addr %s1306, 8
      %s1308 = scalar_lea.vmem %s8, %s1307
      // Predicated region
      $region61: #{down1d_forward.1} parent=51 // pred_check
        %p1309 = pneg %p233
      $region62: #{down1d_forward.1} parent=51 // pred_check_branch
        %1311 = sbr.rel (%p1309) target = $region64
      $region63: #{down1d_forward.1} parent=51 // pred_region
        %s1312 = smul.u32 8, %s24
      $region64: #{down1d_forward.1} parent=51 // pred_fallthru
        _
    $region52: #{down1d_forward.1} parent=5 // pred_fallthru
      _
    %p1313 = scmp.le.s32.totalorder 2, %s14
    // Predicated region
    $region65: #{down1d_forward.1} parent=5 // pred_check
      %p1314 = pneg %p1313
    $region66: #{down1d_forward.1} parent=5 // pred_check_branch
      %1316 = sbr.rel (%p1314) target = $region68
    $region67: #{down1d_forward.1} parent=5 // pred_region
      %s1317 = ssub.s32 %s14, 2
      // Predicated region
      $region69: #{down1d_forward.1} parent=67 // pred_check
        %p1318 = pneg %p239
      $region70: #{down1d_forward.1} parent=67 // pred_check_branch
        %1320 = sbr.rel (%p1318) target = $region72
      $region71: #{down1d_forward.1} parent=67 // pred_region
        %s1321 = smul.u32 8, %s26
        %p1322 = scmp.lt.s32.totalorder %s25, 1
        %s1323 = scalar_select %p1322, %s25, 1
        %p1324 = scmp.lt.s32.totalorder %s1321, 15
        %s1325 = scalar_select %p1324, %s1321, 15
        %s1326 = smul.addr %s1323, 16
        %s1327 = sadd.s32 %s1325, %s1326
        %s1328 = smul.addr %s1327, 8
        %s1329 = scalar_lea.vmem %s8, %s1328
      $region72: #{down1d_forward.1} parent=67 // pred_fallthru
        _
    $region68: #{down1d_forward.1} parent=5 // pred_fallthru
      _
  $region6: #{down1d_forward.1} parent=0 // loop_footer
    %s18 = sadd.s32 1, %s14
  $region7: #{down1d_forward.1} parent=0 // loop_footer_branch
    %13 = sbr.rel target = $region3
  $region8: #{down1d_forward.1} parent=0 // loop_exit
    _

</llo_original>
